<compile_context>
chip_gen: v5e
topology: v5e:2x2
jax: 0.10.0
libtpu: 0.0.40
codegen_flags: <defaults>
</compile_context>

<pallas_src>
import math

import jax
import jax.numpy as jnp
from jax.experimental import pallas as pl
from jax.experimental.pallas import tpu as pltpu

NUM_OF_FEATURES = 5
NUM_OF_LANES = 12
INPUT_DIM = NUM_OF_LANES * NUM_OF_FEATURES  # 60
LSTM_UNITS = 64
FC_DIMS = [200, 8]
ACTION_DIM = 8

H_PAD = 128      # per-gate lane width (64 -> 128) so every gate slice is vreg-aligned
FC1_PAD = 256    # 200 -> 256 (lane multiple)
OUT_PAD = 128    # 8   -> 128 (lane multiple) for fc2 / actor head / logits


def _round_up(n, m):
    return -(-n // m) * m


def lstm_actor_kernel(x_ref, wih_ref, b_ref, whh_ref, w1_ref, b1_ref,
                      w2_ref, b2_ref, wh_ref, bh_ref, logits_ref, hc_ref):
    """Fused input projection + sequential LSTM recurrence + MLP head.

    x_ref   : (T, Bt, Dp)   time-major inputs, Dp = 64 (60 real features)
    wih_ref : (Dp, 4*HP)    input weights, gate order (i, f, o, g), each gate
                            padded to HP=128 lanes (padding columns are zero)
    whh_ref : (HP, 4*HP)    recurrent weights, same layout (padding rows zero)
    b_ref   : (1, 4*HP)     fused b_ih + b_hh, same layout
    """
    T, Bt, _ = x_ref.shape
    HP = whh_ref.shape[0]          # 128
    S = 3 * HP                     # contiguous sigmoid region: i | f | o

    # Hoist the bias broadcast once (JAX does not CSE broadcast_in_dim).
    bias = jnp.broadcast_to(b_ref[...], (Bt, 4 * HP))

    h = jnp.zeros((Bt, HP), jnp.float32)
    c = jnp.zeros((Bt, HP), jnp.float32)

    # Fully unrolled static-T recurrence.  The x @ W_ih^T term of each step has
    # no dependence on (h, c), so the scheduler can issue those MXU passes
    # ahead of / overlapped with the serial h @ W_hh^T chain.  Weight refs are
    # read inside the loop (cheap VMEM vld) rather than pinned in vregs.
    for t in range(T):
        z = (jnp.dot(x_ref[t], wih_ref[...], preferred_element_type=jnp.float32)
             + jnp.dot(h, whh_ref[...], preferred_element_type=jnp.float32)
             + bias)
        sig = jax.nn.sigmoid(z[:, :S])       # one contiguous EUP region (i,f,o)
        g = jnp.tanh(z[:, S:])               # tail region (g)
        i = sig[:, 0:HP]                     # vreg-aligned 128-lane slices
        f = sig[:, HP:2 * HP]
        o = sig[:, 2 * HP:3 * HP]
        c = f * c + i * g                    # padding lanes provably stay 0
        h = o * jnp.tanh(c)

    # MLP head on the last hidden state; all operands lane-padded so every
    # matmul / store is lane-dense (padded columns stay exactly zero).
    a1 = jnp.maximum(
        jnp.dot(h, w1_ref[...], preferred_element_type=jnp.float32)
        + b1_ref[...], 0.0)
    a2 = jnp.maximum(
        jnp.dot(a1, w2_ref[...], preferred_element_type=jnp.float32)
        + b2_ref[...], 0.0)
    logits_ref[...] = (
        jnp.dot(a2, wh_ref[...], preferred_element_type=jnp.float32)
        + bh_ref[...])
    # Lane-dense packed [h | c] store: one 256-wide unmasked store instead of
    # two 64-wide masked partial stores.
    hc_ref[...] = jnp.concatenate([h, c], axis=1)


def init_params(key):
    """Deterministic PyTorch-style uniform(-1/sqrt(fan_in), 1/sqrt(fan_in)) init."""
    def uni(k, shape, bound):
        return jax.random.uniform(k, shape, jnp.float32, -bound, bound)

    keys = jax.random.split(key, 10)
    H = LSTM_UNITS
    kb_lstm = 1.0 / math.sqrt(H)
    kb_fc1 = 1.0 / math.sqrt(H)
    kb_fc2 = 1.0 / math.sqrt(FC_DIMS[0])
    kb_head = 1.0 / math.sqrt(FC_DIMS[1])
    return dict(
        w_ih=uni(keys[0], (4 * H, INPUT_DIM), kb_lstm),
        w_hh=uni(keys[1], (4 * H, H), kb_lstm),
        b_ih=uni(keys[2], (4 * H,), kb_lstm),
        b_hh=uni(keys[3], (4 * H,), kb_lstm),
        w1=uni(keys[4], (FC_DIMS[0], H), kb_fc1),
        b1=uni(keys[5], (FC_DIMS[0],), kb_fc1),
        w2=uni(keys[6], (FC_DIMS[1], FC_DIMS[0]), kb_fc2),
        b2=uni(keys[7], (FC_DIMS[1],), kb_fc2),
        wh=uni(keys[8], (ACTION_DIM, FC_DIMS[1]), kb_head),
        bh=uni(keys[9], (ACTION_DIM,), kb_head),
    )


@jax.jit
def lstm_actor_forward(x, params):
    """x: (B, T, D) batch_first float32, hidden_state=None (like the PyTorch module).

    Returns (logits (B, action_dim), (h_n (1, B, H), c_n (1, B, H))).
    """
    B, T, D = x.shape
    H = LSTM_UNITS
    HP = H_PAD
    x = x.astype(jnp.float32)

    # ---- weight packing: gate order (i,f,g,o) -> (i,f,o,g), each gate padded
    # ---- to a full 128-lane group so every in-kernel slice is vreg-aligned.
    def split_gates(w):                       # PyTorch rows: i | f | g | o
        return w[0:H], w[H:2 * H], w[2 * H:3 * H], w[3 * H:4 * H]

    wi, wf, wg, wo = split_gates(params["w_ih"])          # each (H, D)
    ui, uf, ug, uo = split_gates(params["w_hh"])           # each (H, H)
    bi, bf_, bg, bo = split_gates(params["b_ih"] + params["b_hh"])

    D_PAD = _round_up(D, 8)                                 # 60 -> 64

    def pack_w(ws, rows_pad):                 # [(H, K)] -> (rows_pad, 4*HP)
        cols = [jnp.pad(w.T, ((0, rows_pad - w.shape[1]), (0, HP - H)))
                for w in ws]
        return jnp.concatenate(cols, axis=1)

    wih_t = pack_w([wi, wf, wo, wg], D_PAD)                 # (64, 512)
    whh_t = pack_w([ui, uf, uo, ug], HP)                    # (128, 512)
    b_g = jnp.concatenate(
        [jnp.pad(b, (0, HP - H)) for b in (bi, bf_, bo, bg)]).reshape(1, -1)

    w1_t = jnp.pad(params["w1"].T, ((0, HP - H), (0, FC1_PAD - FC_DIMS[0])))
    b1 = jnp.pad(params["b1"], (0, FC1_PAD - FC_DIMS[0])).reshape(1, -1)
    w2_t = jnp.pad(params["w2"].T,
                   ((0, FC1_PAD - FC_DIMS[0]), (0, OUT_PAD - FC_DIMS[1])))
    b2 = jnp.pad(params["b2"], (0, OUT_PAD - FC_DIMS[1])).reshape(1, -1)
    wh_t = jnp.pad(params["wh"].T,
                   ((0, OUT_PAD - FC_DIMS[1]), (0, OUT_PAD - ACTION_DIM)))
    bh = jnp.pad(params["bh"], (0, OUT_PAD - ACTION_DIM)).reshape(1, -1)

    # ---- adaptive batch tiling: up to 128 rows per tile, and >=2 tiles when
    # ---- B allows it so both v7x TensorCores get work (no-op on v5e/v6e).
    B_pad = _round_up(B, 8)
    b_tile = min(128, max(8, _round_up(pl.cdiv(B_pad, 2), 8)))
    B_pad = _round_up(B_pad, b_tile)
    grid = (B_pad // b_tile,)

    # Time-major x (cheap: x is ~4x smaller than the old materialized Z).
    x_p = jnp.pad(x, ((0, B_pad - B), (0, 0), (0, D_PAD - D)))
    x_tm = jnp.transpose(x_p, (1, 0, 2))                    # (T, B_pad, D_PAD)

    out_shapes = (
        jax.ShapeDtypeStruct((B_pad, OUT_PAD), jnp.float32),   # padded logits
        jax.ShapeDtypeStruct((B_pad, 2 * HP), jnp.float32),    # packed [h | c]
    )
    in_specs = [
        pl.BlockSpec((T, b_tile, D_PAD), lambda b: (0, b, 0)),   # x (time-major)
        pl.BlockSpec((D_PAD, 4 * HP), lambda b: (0, 0)),         # W_ih^T
        pl.BlockSpec((1, 4 * HP), lambda b: (0, 0)),             # bias
        pl.BlockSpec((HP, 4 * HP), lambda b: (0, 0)),            # W_hh^T
        pl.BlockSpec((HP, FC1_PAD), lambda b: (0, 0)),           # W1^T
        pl.BlockSpec((1, FC1_PAD), lambda b: (0, 0)),            # b1
        pl.BlockSpec((FC1_PAD, OUT_PAD), lambda b: (0, 0)),      # W2^T
        pl.BlockSpec((1, OUT_PAD), lambda b: (0, 0)),            # b2
        pl.BlockSpec((OUT_PAD, OUT_PAD), lambda b: (0, 0)),      # Wh^T
        pl.BlockSpec((1, OUT_PAD), lambda b: (0, 0)),            # bh
    ]
    out_specs = (
        pl.BlockSpec((b_tile, OUT_PAD), lambda b: (b, 0)),
        pl.BlockSpec((b_tile, 2 * HP), lambda b: (b, 0)),
    )

    logits_p, hc_p = pl.pallas_call(
        lstm_actor_kernel,
        out_shape=out_shapes,
        grid=grid,
        in_specs=in_specs,
        out_specs=out_specs,
        compiler_params=pltpu.CompilerParams(
            dimension_semantics=("parallel",)),
    )(x_tm, wih_t, b_g, whh_t, w1_t, b1, w2_t, b2, wh_t, bh)

    logits = logits_p[:B, :ACTION_DIM]
    # Match PyTorch nn.LSTM hidden shapes: (num_layers=1, B, H)
    h_n = hc_p[:B, 0:H][None, :, :]
    c_n = hc_p[:B, HP:HP + H][None, :, :]
    return logits, (h_n, c_n)


def lstm_actor_reference(x, params):
    """Pure-JAX reference with exact PyTorch nn.LSTM gate order (i, f, g, o).

    Uses HIGHEST matmul precision so the all-f32 comparison against the
    (full-precision MXU) Pallas path can use a tight tolerance.
    """
    B, T, _ = x.shape
    H = LSTM_UNITS
    hp = jax.lax.Precision.HIGHEST
    h = jnp.zeros((B, H), jnp.float32)
    c = jnp.zeros((B, H), jnp.float32)
    b = params["b_ih"] + params["b_hh"]
    for t in range(T):
        z = (jnp.dot(x[:, t, :], params["w_ih"].T, precision=hp)
             + jnp.dot(h, params["w_hh"].T, precision=hp) + b)
        i = jax.nn.sigmoid(z[:, 0:H])
        f = jax.nn.sigmoid(z[:, H:2 * H])
        g = jnp.tanh(z[:, 2 * H:3 * H])
        o = jax.nn.sigmoid(z[:, 3 * H:4 * H])
        c = f * c + i * g
        h = o * jnp.tanh(c)
    a1 = jax.nn.relu(jnp.dot(h, params["w1"].T, precision=hp) + params["b1"])
    a2 = jax.nn.relu(jnp.dot(a1, params["w2"].T, precision=hp) + params["b2"])
    logits = jnp.dot(a2, params["wh"].T, precision=hp) + params["bh"]
    return logits, h, c


if __name__ == "__main__":
    key = jax.random.PRNGKey(0)
    k_param, k_x = jax.random.split(key)

    params = init_params(k_param)

    B, T = 2, 8
    x = jax.random.normal(k_x, (B, T, INPUT_DIM), dtype=jnp.float32)

    logits, (h_n, c_n) = lstm_actor_forward(x, params)
    jax.block_until_ready((logits, h_n, c_n))

    assert logits.shape == (B, ACTION_DIM)
    assert h_n.shape == (1, B, LSTM_UNITS)
    assert c_n.shape == (1, B, LSTM_UNITS)

    ref_logits, ref_h, ref_c = lstm_actor_reference(x, params)
    # Tightened vs. previous 1e-2: both paths are f32 end-to-end (MXU multi-pass
    # f32 vs XLA HIGHEST differ only in summation order, ~1e-6).
    assert jnp.allclose(logits, ref_logits, atol=2e-4, rtol=2e-4)
    assert jnp.allclose(h_n[0], ref_h, atol=2e-4, rtol=2e-4)
    assert jnp.allclose(c_n[0], ref_c, atol=2e-4, rtol=2e-4)

    print("KERNEL_OK")
</pallas_src>

<mosaic_0001>
module attributes {stable_mosaic.version = 11 : i64} {
  func.func @lstm_actor_kernel(%arg0: i32, %arg1: memref<8x8x64xf32, #tpu.memory_space<vmem>>, %arg2: memref<64x512xf32, #tpu.memory_space<vmem>>, %arg3: memref<1x512xf32, #tpu.memory_space<vmem>>, %arg4: memref<128x512xf32, #tpu.memory_space<vmem>>, %arg5: memref<128x256xf32, #tpu.memory_space<vmem>>, %arg6: memref<1x256xf32, #tpu.memory_space<vmem>>, %arg7: memref<256x128xf32, #tpu.memory_space<vmem>>, %arg8: memref<1x128xf32, #tpu.memory_space<vmem>>, %arg9: memref<128x128xf32, #tpu.memory_space<vmem>>, %arg10: memref<1x128xf32, #tpu.memory_space<vmem>>, %arg11: memref<8x128xf32, #tpu.memory_space<vmem>>, %arg12: memref<8x256xf32, #tpu.memory_space<vmem>>) attributes {dimension_semantics = [#tpu.dimension_semantics<parallel>], iteration_bounds = array<i64: 1>, scalar_prefetch = 0 : i64, scratch_operands = 0 : i64, tpu.core_type = #tpu.core_type<tc>, window_params = [{transform_indices = @transform_0, window_bounds = array<i64: 8, 8, 64>}, {pipeline_mode = #tpu.pipeline_mode<synchronous>, transform_indices = @transform_1, window_bounds = array<i64: 64, 512>}, {pipeline_mode = #tpu.pipeline_mode<synchronous>, transform_indices = @transform_2, window_bounds = array<i64: 1, 512>}, {pipeline_mode = #tpu.pipeline_mode<synchronous>, transform_indices = @transform_3, window_bounds = array<i64: 128, 512>}, {pipeline_mode = #tpu.pipeline_mode<synchronous>, transform_indices = @transform_4, window_bounds = array<i64: 128, 256>}, {pipeline_mode = #tpu.pipeline_mode<synchronous>, transform_indices = @transform_5, window_bounds = array<i64: 1, 256>}, {pipeline_mode = #tpu.pipeline_mode<synchronous>, transform_indices = @transform_6, window_bounds = array<i64: 256, 128>}, {pipeline_mode = #tpu.pipeline_mode<synchronous>, transform_indices = @transform_7, window_bounds = array<i64: 1, 128>}, {pipeline_mode = #tpu.pipeline_mode<synchronous>, transform_indices = @transform_8, window_bounds = array<i64: 128, 128>}, {pipeline_mode = #tpu.pipeline_mode<synchronous>, transform_indices = @transform_9, window_bounds = array<i64: 1, 128>}, {transform_indices = @transform_10, window_bounds = array<i64: 8, 128>}, {transform_indices = @transform_11, window_bounds = array<i64: 8, 256>}]} {
    %c0 = arith.constant 0 : index
    %c0_0 = arith.constant 0 : index
    %0 = vector.load %arg3[%c0, %c0_0] : memref<1x512xf32, #tpu.memory_space<vmem>>, vector<1x512xf32>
    %1 = vector.shape_cast %0 : vector<1x512xf32> to vector<1x512xf32>
    %2 = vector.broadcast %1 : vector<1x512xf32> to vector<8x512xf32>
    %cst = arith.constant 0.000000e+00 : f32
    %3 = vector.broadcast %cst : f32 to vector<8x128xf32>
    %cst_1 = arith.constant 0.000000e+00 : f32
    %4 = vector.broadcast %cst_1 : f32 to vector<8x128xf32>
    %c0_2 = arith.constant 0 : index
    %c0_3 = arith.constant 0 : index
    %c0_4 = arith.constant 0 : index
    %5 = vector.load %arg1[%c0_2, %c0_3, %c0_4] : memref<8x8x64xf32, #tpu.memory_space<vmem>>, vector<1x8x64xf32>
    %6 = vector.shape_cast %5 : vector<1x8x64xf32> to vector<8x64xf32>
    %c0_5 = arith.constant 0 : index
    %c0_6 = arith.constant 0 : index
    %7 = vector.load %arg2[%c0_5, %c0_6] : memref<64x512xf32, #tpu.memory_space<vmem>>, vector<64x512xf32>
    %cst_7 = arith.constant dense<0.000000e+00> : vector<8x512xf32>
    %8 = tpu.matmul %6, %7, %cst_7 {dimension_numbers = #tpu.dot_dimension_numbers<[1], [0], [0], [1], [0, 0, 1, 1], [], []>} : vector<8x64xf32>, vector<64x512xf32>, vector<8x512xf32> -> vector<8x512xf32>
    %c0_8 = arith.constant 0 : index
    %c0_9 = arith.constant 0 : index
    %9 = vector.load %arg4[%c0_8, %c0_9] : memref<128x512xf32, #tpu.memory_space<vmem>>, vector<128x512xf32>
    %cst_10 = arith.constant dense<0.000000e+00> : vector<8x512xf32>
    %10 = tpu.matmul %3, %9, %cst_10 {dimension_numbers = #tpu.dot_dimension_numbers<[1], [0], [0], [1], [0, 0, 1, 1], [], []>} : vector<8x128xf32>, vector<128x512xf32>, vector<8x512xf32> -> vector<8x512xf32>
    %11 = arith.addf %8, %10 : vector<8x512xf32>
    %12 = arith.addf %11, %2 : vector<8x512xf32>
    %13 = vector.extract_strided_slice %12 {offsets = [0, 0], sizes = [8, 384], strides = [1, 1]} : vector<8x512xf32> to vector<8x384xf32>
    %14 = arith.negf %13 : vector<8x384xf32>
    %15 = math.exp %14 : vector<8x384xf32>
    %cst_11 = arith.constant 1.000000e+00 : f32
    %16 = vector.broadcast %cst_11 : f32 to vector<8x384xf32>
    %17 = arith.addf %16, %15 : vector<8x384xf32>
    %18 = arith.divf %16, %17 : vector<8x384xf32>
    %19 = vector.extract_strided_slice %12 {offsets = [0, 384], sizes = [8, 128], strides = [1, 1]} : vector<8x512xf32> to vector<8x128xf32>
    %20 = math.tanh %19 : vector<8x128xf32>
    %21 = vector.extract_strided_slice %18 {offsets = [0, 0], sizes = [8, 128], strides = [1, 1]} : vector<8x384xf32> to vector<8x128xf32>
    %22 = vector.extract_strided_slice %18 {offsets = [0, 128], sizes = [8, 128], strides = [1, 1]} : vector<8x384xf32> to vector<8x128xf32>
    %23 = vector.extract_strided_slice %18 {offsets = [0, 256], sizes = [8, 128], strides = [1, 1]} : vector<8x384xf32> to vector<8x128xf32>
    %24 = arith.mulf %22, %4 : vector<8x128xf32>
    %25 = arith.mulf %21, %20 : vector<8x128xf32>
    %26 = arith.addf %24, %25 : vector<8x128xf32>
    %27 = math.tanh %26 : vector<8x128xf32>
    %28 = arith.mulf %23, %27 : vector<8x128xf32>
    %c1 = arith.constant 1 : index
    %c0_12 = arith.constant 0 : index
    %c0_13 = arith.constant 0 : index
    %29 = vector.load %arg1[%c1, %c0_12, %c0_13] : memref<8x8x64xf32, #tpu.memory_space<vmem>>, vector<1x8x64xf32>
    %30 = vector.shape_cast %29 : vector<1x8x64xf32> to vector<8x64xf32>
    %c0_14 = arith.constant 0 : index
    %c0_15 = arith.constant 0 : index
    %31 = vector.load %arg2[%c0_14, %c0_15] : memref<64x512xf32, #tpu.memory_space<vmem>>, vector<64x512xf32>
    %cst_16 = arith.constant dense<0.000000e+00> : vector<8x512xf32>
    %32 = tpu.matmul %30, %31, %cst_16 {dimension_numbers = #tpu.dot_dimension_numbers<[1], [0], [0], [1], [0, 0, 1, 1], [], []>} : vector<8x64xf32>, vector<64x512xf32>, vector<8x512xf32> -> vector<8x512xf32>
    %c0_17 = arith.constant 0 : index
    %c0_18 = arith.constant 0 : index
    %33 = vector.load %arg4[%c0_17, %c0_18] : memref<128x512xf32, #tpu.memory_space<vmem>>, vector<128x512xf32>
    %cst_19 = arith.constant dense<0.000000e+00> : vector<8x512xf32>
    %34 = tpu.matmul %28, %33, %cst_19 {dimension_numbers = #tpu.dot_dimension_numbers<[1], [0], [0], [1], [0, 0, 1, 1], [], []>} : vector<8x128xf32>, vector<128x512xf32>, vector<8x512xf32> -> vector<8x512xf32>
    %35 = arith.addf %32, %34 : vector<8x512xf32>
    %36 = arith.addf %35, %2 : vector<8x512xf32>
    %37 = vector.extract_strided_slice %36 {offsets = [0, 0], sizes = [8, 384], strides = [1, 1]} : vector<8x512xf32> to vector<8x384xf32>
    %38 = arith.negf %37 : vector<8x384xf32>
    %39 = math.exp %38 : vector<8x384xf32>
    %cst_20 = arith.constant 1.000000e+00 : f32
    %40 = vector.broadcast %cst_20 : f32 to vector<8x384xf32>
    %41 = arith.addf %40, %39 : vector<8x384xf32>
    %42 = arith.divf %40, %41 : vector<8x384xf32>
    %43 = vector.extract_strided_slice %36 {offsets = [0, 384], sizes = [8, 128], strides = [1, 1]} : vector<8x512xf32> to vector<8x128xf32>
    %44 = math.tanh %43 : vector<8x128xf32>
    %45 = vector.extract_strided_slice %42 {offsets = [0, 0], sizes = [8, 128], strides = [1, 1]} : vector<8x384xf32> to vector<8x128xf32>
    %46 = vector.extract_strided_slice %42 {offsets = [0, 128], sizes = [8, 128], strides = [1, 1]} : vector<8x384xf32> to vector<8x128xf32>
    %47 = vector.extract_strided_slice %42 {offsets = [0, 256], sizes = [8, 128], strides = [1, 1]} : vector<8x384xf32> to vector<8x128xf32>
    %48 = arith.mulf %46, %26 : vector<8x128xf32>
    %49 = arith.mulf %45, %44 : vector<8x128xf32>
    %50 = arith.addf %48, %49 : vector<8x128xf32>
    %51 = math.tanh %50 : vector<8x128xf32>
    %52 = arith.mulf %47, %51 : vector<8x128xf32>
    %c2 = arith.constant 2 : index
    %c0_21 = arith.constant 0 : index
    %c0_22 = arith.constant 0 : index
    %53 = vector.load %arg1[%c2, %c0_21, %c0_22] : memref<8x8x64xf32, #tpu.memory_space<vmem>>, vector<1x8x64xf32>
    %54 = vector.shape_cast %53 : vector<1x8x64xf32> to vector<8x64xf32>
    %c0_23 = arith.constant 0 : index
    %c0_24 = arith.constant 0 : index
    %55 = vector.load %arg2[%c0_23, %c0_24] : memref<64x512xf32, #tpu.memory_space<vmem>>, vector<64x512xf32>
    %cst_25 = arith.constant dense<0.000000e+00> : vector<8x512xf32>
    %56 = tpu.matmul %54, %55, %cst_25 {dimension_numbers = #tpu.dot_dimension_numbers<[1], [0], [0], [1], [0, 0, 1, 1], [], []>} : vector<8x64xf32>, vector<64x512xf32>, vector<8x512xf32> -> vector<8x512xf32>
    %c0_26 = arith.constant 0 : index
    %c0_27 = arith.constant 0 : index
    %57 = vector.load %arg4[%c0_26, %c0_27] : memref<128x512xf32, #tpu.memory_space<vmem>>, vector<128x512xf32>
    %cst_28 = arith.constant dense<0.000000e+00> : vector<8x512xf32>
    %58 = tpu.matmul %52, %57, %cst_28 {dimension_numbers = #tpu.dot_dimension_numbers<[1], [0], [0], [1], [0, 0, 1, 1], [], []>} : vector<8x128xf32>, vector<128x512xf32>, vector<8x512xf32> -> vector<8x512xf32>
    %59 = arith.addf %56, %58 : vector<8x512xf32>
    %60 = arith.addf %59, %2 : vector<8x512xf32>
    %61 = vector.extract_strided_slice %60 {offsets = [0, 0], sizes = [8, 384], strides = [1, 1]} : vector<8x512xf32> to vector<8x384xf32>
    %62 = arith.negf %61 : vector<8x384xf32>
    %63 = math.exp %62 : vector<8x384xf32>
    %cst_29 = arith.constant 1.000000e+00 : f32
    %64 = vector.broadcast %cst_29 : f32 to vector<8x384xf32>
    %65 = arith.addf %64, %63 : vector<8x384xf32>
    %66 = arith.divf %64, %65 : vector<8x384xf32>
    %67 = vector.extract_strided_slice %60 {offsets = [0, 384], sizes = [8, 128], strides = [1, 1]} : vector<8x512xf32> to vector<8x128xf32>
    %68 = math.tanh %67 : vector<8x128xf32>
    %69 = vector.extract_strided_slice %66 {offsets = [0, 0], sizes = [8, 128], strides = [1, 1]} : vector<8x384xf32> to vector<8x128xf32>
    %70 = vector.extract_strided_slice %66 {offsets = [0, 128], sizes = [8, 128], strides = [1, 1]} : vector<8x384xf32> to vector<8x128xf32>
    %71 = vector.extract_strided_slice %66 {offsets = [0, 256], sizes = [8, 128], strides = [1, 1]} : vector<8x384xf32> to vector<8x128xf32>
    %72 = arith.mulf %70, %50 : vector<8x128xf32>
    %73 = arith.mulf %69, %68 : vector<8x128xf32>
    %74 = arith.addf %72, %73 : vector<8x128xf32>
    %75 = math.tanh %74 : vector<8x128xf32>
    %76 = arith.mulf %71, %75 : vector<8x128xf32>
    %c3 = arith.constant 3 : index
    %c0_30 = arith.constant 0 : index
    %c0_31 = arith.constant 0 : index
    %77 = vector.load %arg1[%c3, %c0_30, %c0_31] : memref<8x8x64xf32, #tpu.memory_space<vmem>>, vector<1x8x64xf32>
    %78 = vector.shape_cast %77 : vector<1x8x64xf32> to vector<8x64xf32>
    %c0_32 = arith.constant 0 : index
    %c0_33 = arith.constant 0 : index
    %79 = vector.load %arg2[%c0_32, %c0_33] : memref<64x512xf32, #tpu.memory_space<vmem>>, vector<64x512xf32>
    %cst_34 = arith.constant dense<0.000000e+00> : vector<8x512xf32>
    %80 = tpu.matmul %78, %79, %cst_34 {dimension_numbers = #tpu.dot_dimension_numbers<[1], [0], [0], [1], [0, 0, 1, 1], [], []>} : vector<8x64xf32>, vector<64x512xf32>, vector<8x512xf32> -> vector<8x512xf32>
    %c0_35 = arith.constant 0 : index
    %c0_36 = arith.constant 0 : index
    %81 = vector.load %arg4[%c0_35, %c0_36] : memref<128x512xf32, #tpu.memory_space<vmem>>, vector<128x512xf32>
    %cst_37 = arith.constant dense<0.000000e+00> : vector<8x512xf32>
    %82 = tpu.matmul %76, %81, %cst_37 {dimension_numbers = #tpu.dot_dimension_numbers<[1], [0], [0], [1], [0, 0, 1, 1], [], []>} : vector<8x128xf32>, vector<128x512xf32>, vector<8x512xf32> -> vector<8x512xf32>
    %83 = arith.addf %80, %82 : vector<8x512xf32>
    %84 = arith.addf %83, %2 : vector<8x512xf32>
    %85 = vector.extract_strided_slice %84 {offsets = [0, 0], sizes = [8, 384], strides = [1, 1]} : vector<8x512xf32> to vector<8x384xf32>
    %86 = arith.negf %85 : vector<8x384xf32>
    %87 = math.exp %86 : vector<8x384xf32>
    %cst_38 = arith.constant 1.000000e+00 : f32
    %88 = vector.broadcast %cst_38 : f32 to vector<8x384xf32>
    %89 = arith.addf %88, %87 : vector<8x384xf32>
    %90 = arith.divf %88, %89 : vector<8x384xf32>
    %91 = vector.extract_strided_slice %84 {offsets = [0, 384], sizes = [8, 128], strides = [1, 1]} : vector<8x512xf32> to vector<8x128xf32>
    %92 = math.tanh %91 : vector<8x128xf32>
    %93 = vector.extract_strided_slice %90 {offsets = [0, 0], sizes = [8, 128], strides = [1, 1]} : vector<8x384xf32> to vector<8x128xf32>
    %94 = vector.extract_strided_slice %90 {offsets = [0, 128], sizes = [8, 128], strides = [1, 1]} : vector<8x384xf32> to vector<8x128xf32>
    %95 = vector.extract_strided_slice %90 {offsets = [0, 256], sizes = [8, 128], strides = [1, 1]} : vector<8x384xf32> to vector<8x128xf32>
    %96 = arith.mulf %94, %74 : vector<8x128xf32>
    %97 = arith.mulf %93, %92 : vector<8x128xf32>
    %98 = arith.addf %96, %97 : vector<8x128xf32>
    %99 = math.tanh %98 : vector<8x128xf32>
    %100 = arith.mulf %95, %99 : vector<8x128xf32>
    %c4 = arith.constant 4 : index
    %c0_39 = arith.constant 0 : index
    %c0_40 = arith.constant 0 : index
    %101 = vector.load %arg1[%c4, %c0_39, %c0_40] : memref<8x8x64xf32, #tpu.memory_space<vmem>>, vector<1x8x64xf32>
    %102 = vector.shape_cast %101 : vector<1x8x64xf32> to vector<8x64xf32>
    %c0_41 = arith.constant 0 : index
    %c0_42 = arith.constant 0 : index
    %103 = vector.load %arg2[%c0_41, %c0_42] : memref<64x512xf32, #tpu.memory_space<vmem>>, vector<64x512xf32>
    %cst_43 = arith.constant dense<0.000000e+00> : vector<8x512xf32>
    %104 = tpu.matmul %102, %103, %cst_43 {dimension_numbers = #tpu.dot_dimension_numbers<[1], [0], [0], [1], [0, 0, 1, 1], [], []>} : vector<8x64xf32>, vector<64x512xf32>, vector<8x512xf32> -> vector<8x512xf32>
    %c0_44 = arith.constant 0 : index
    %c0_45 = arith.constant 0 : index
    %105 = vector.load %arg4[%c0_44, %c0_45] : memref<128x512xf32, #tpu.memory_space<vmem>>, vector<128x512xf32>
    %cst_46 = arith.constant dense<0.000000e+00> : vector<8x512xf32>
    %106 = tpu.matmul %100, %105, %cst_46 {dimension_numbers = #tpu.dot_dimension_numbers<[1], [0], [0], [1], [0, 0, 1, 1], [], []>} : vector<8x128xf32>, vector<128x512xf32>, vector<8x512xf32> -> vector<8x512xf32>
    %107 = arith.addf %104, %106 : vector<8x512xf32>
    %108 = arith.addf %107, %2 : vector<8x512xf32>
    %109 = vector.extract_strided_slice %108 {offsets = [0, 0], sizes = [8, 384], strides = [1, 1]} : vector<8x512xf32> to vector<8x384xf32>
    %110 = arith.negf %109 : vector<8x384xf32>
    %111 = math.exp %110 : vector<8x384xf32>
    %cst_47 = arith.constant 1.000000e+00 : f32
    %112 = vector.broadcast %cst_47 : f32 to vector<8x384xf32>
    %113 = arith.addf %112, %111 : vector<8x384xf32>
    %114 = arith.divf %112, %113 : vector<8x384xf32>
    %115 = vector.extract_strided_slice %108 {offsets = [0, 384], sizes = [8, 128], strides = [1, 1]} : vector<8x512xf32> to vector<8x128xf32>
    %116 = math.tanh %115 : vector<8x128xf32>
    %117 = vector.extract_strided_slice %114 {offsets = [0, 0], sizes = [8, 128], strides = [1, 1]} : vector<8x384xf32> to vector<8x128xf32>
    %118 = vector.extract_strided_slice %114 {offsets = [0, 128], sizes = [8, 128], strides = [1, 1]} : vector<8x384xf32> to vector<8x128xf32>
    %119 = vector.extract_strided_slice %114 {offsets = [0, 256], sizes = [8, 128], strides = [1, 1]} : vector<8x384xf32> to vector<8x128xf32>
    %120 = arith.mulf %118, %98 : vector<8x128xf32>
    %121 = arith.mulf %117, %116 : vector<8x128xf32>
    %122 = arith.addf %120, %121 : vector<8x128xf32>
    %123 = math.tanh %122 : vector<8x128xf32>
    %124 = arith.mulf %119, %123 : vector<8x128xf32>
    %c5 = arith.constant 5 : index
    %c0_48 = arith.constant 0 : index
    %c0_49 = arith.constant 0 : index
    %125 = vector.load %arg1[%c5, %c0_48, %c0_49] : memref<8x8x64xf32, #tpu.memory_space<vmem>>, vector<1x8x64xf32>
    %126 = vector.shape_cast %125 : vector<1x8x64xf32> to vector<8x64xf32>
    %c0_50 = arith.constant 0 : index
    %c0_51 = arith.constant 0 : index
    %127 = vector.load %arg2[%c0_50, %c0_51] : memref<64x512xf32, #tpu.memory_space<vmem>>, vector<64x512xf32>
    %cst_52 = arith.constant dense<0.000000e+00> : vector<8x512xf32>
    %128 = tpu.matmul %126, %127, %cst_52 {dimension_numbers = #tpu.dot_dimension_numbers<[1], [0], [0], [1], [0, 0, 1, 1], [], []>} : vector<8x64xf32>, vector<64x512xf32>, vector<8x512xf32> -> vector<8x512xf32>
    %c0_53 = arith.constant 0 : index
    %c0_54 = arith.constant 0 : index
    %129 = vector.load %arg4[%c0_53, %c0_54] : memref<128x512xf32, #tpu.memory_space<vmem>>, vector<128x512xf32>
    %cst_55 = arith.constant dense<0.000000e+00> : vector<8x512xf32>
    %130 = tpu.matmul %124, %129, %cst_55 {dimension_numbers = #tpu.dot_dimension_numbers<[1], [0], [0], [1], [0, 0, 1, 1], [], []>} : vector<8x128xf32>, vector<128x512xf32>, vector<8x512xf32> -> vector<8x512xf32>
    %131 = arith.addf %128, %130 : vector<8x512xf32>
    %132 = arith.addf %131, %2 : vector<8x512xf32>
    %133 = vector.extract_strided_slice %132 {offsets = [0, 0], sizes = [8, 384], strides = [1, 1]} : vector<8x512xf32> to vector<8x384xf32>
    %134 = arith.negf %133 : vector<8x384xf32>
    %135 = math.exp %134 : vector<8x384xf32>
    %cst_56 = arith.constant 1.000000e+00 : f32
    %136 = vector.broadcast %cst_56 : f32 to vector<8x384xf32>
    %137 = arith.addf %136, %135 : vector<8x384xf32>
    %138 = arith.divf %136, %137 : vector<8x384xf32>
    %139 = vector.extract_strided_slice %132 {offsets = [0, 384], sizes = [8, 128], strides = [1, 1]} : vector<8x512xf32> to vector<8x128xf32>
    %140 = math.tanh %139 : vector<8x128xf32>
    %141 = vector.extract_strided_slice %138 {offsets = [0, 0], sizes = [8, 128], strides = [1, 1]} : vector<8x384xf32> to vector<8x128xf32>
    %142 = vector.extract_strided_slice %138 {offsets = [0, 128], sizes = [8, 128], strides = [1, 1]} : vector<8x384xf32> to vector<8x128xf32>
    %143 = vector.extract_strided_slice %138 {offsets = [0, 256], sizes = [8, 128], strides = [1, 1]} : vector<8x384xf32> to vector<8x128xf32>
    %144 = arith.mulf %142, %122 : vector<8x128xf32>
    %145 = arith.mulf %141, %140 : vector<8x128xf32>
    %146 = arith.addf %144, %145 : vector<8x128xf32>
    %147 = math.tanh %146 : vector<8x128xf32>
    %148 = arith.mulf %143, %147 : vector<8x128xf32>
    %c6 = arith.constant 6 : index
    %c0_57 = arith.constant 0 : index
    %c0_58 = arith.constant 0 : index
    %149 = vector.load %arg1[%c6, %c0_57, %c0_58] : memref<8x8x64xf32, #tpu.memory_space<vmem>>, vector<1x8x64xf32>
    %150 = vector.shape_cast %149 : vector<1x8x64xf32> to vector<8x64xf32>
    %c0_59 = arith.constant 0 : index
    %c0_60 = arith.constant 0 : index
    %151 = vector.load %arg2[%c0_59, %c0_60] : memref<64x512xf32, #tpu.memory_space<vmem>>, vector<64x512xf32>
    %cst_61 = arith.constant dense<0.000000e+00> : vector<8x512xf32>
    %152 = tpu.matmul %150, %151, %cst_61 {dimension_numbers = #tpu.dot_dimension_numbers<[1], [0], [0], [1], [0, 0, 1, 1], [], []>} : vector<8x64xf32>, vector<64x512xf32>, vector<8x512xf32> -> vector<8x512xf32>
    %c0_62 = arith.constant 0 : index
    %c0_63 = arith.constant 0 : index
    %153 = vector.load %arg4[%c0_62, %c0_63] : memref<128x512xf32, #tpu.memory_space<vmem>>, vector<128x512xf32>
    %cst_64 = arith.constant dense<0.000000e+00> : vector<8x512xf32>
    %154 = tpu.matmul %148, %153, %cst_64 {dimension_numbers = #tpu.dot_dimension_numbers<[1], [0], [0], [1], [0, 0, 1, 1], [], []>} : vector<8x128xf32>, vector<128x512xf32>, vector<8x512xf32> -> vector<8x512xf32>
    %155 = arith.addf %152, %154 : vector<8x512xf32>
    %156 = arith.addf %155, %2 : vector<8x512xf32>
    %157 = vector.extract_strided_slice %156 {offsets = [0, 0], sizes = [8, 384], strides = [1, 1]} : vector<8x512xf32> to vector<8x384xf32>
    %158 = arith.negf %157 : vector<8x384xf32>
    %159 = math.exp %158 : vector<8x384xf32>
    %cst_65 = arith.constant 1.000000e+00 : f32
    %160 = vector.broadcast %cst_65 : f32 to vector<8x384xf32>
    %161 = arith.addf %160, %159 : vector<8x384xf32>
    %162 = arith.divf %160, %161 : vector<8x384xf32>
    %163 = vector.extract_strided_slice %156 {offsets = [0, 384], sizes = [8, 128], strides = [1, 1]} : vector<8x512xf32> to vector<8x128xf32>
    %164 = math.tanh %163 : vector<8x128xf32>
    %165 = vector.extract_strided_slice %162 {offsets = [0, 0], sizes = [8, 128], strides = [1, 1]} : vector<8x384xf32> to vector<8x128xf32>
    %166 = vector.extract_strided_slice %162 {offsets = [0, 128], sizes = [8, 128], strides = [1, 1]} : vector<8x384xf32> to vector<8x128xf32>
    %167 = vector.extract_strided_slice %162 {offsets = [0, 256], sizes = [8, 128], strides = [1, 1]} : vector<8x384xf32> to vector<8x128xf32>
    %168 = arith.mulf %166, %146 : vector<8x128xf32>
    %169 = arith.mulf %165, %164 : vector<8x128xf32>
    %170 = arith.addf %168, %169 : vector<8x128xf32>
    %171 = math.tanh %170 : vector<8x128xf32>
    %172 = arith.mulf %167, %171 : vector<8x128xf32>
    %c7 = arith.constant 7 : index
    %c0_66 = arith.constant 0 : index
    %c0_67 = arith.constant 0 : index
    %173 = vector.load %arg1[%c7, %c0_66, %c0_67] : memref<8x8x64xf32, #tpu.memory_space<vmem>>, vector<1x8x64xf32>
    %174 = vector.shape_cast %173 : vector<1x8x64xf32> to vector<8x64xf32>
    %c0_68 = arith.constant 0 : index
    %c0_69 = arith.constant 0 : index
    %175 = vector.load %arg2[%c0_68, %c0_69] : memref<64x512xf32, #tpu.memory_space<vmem>>, vector<64x512xf32>
    %cst_70 = arith.constant dense<0.000000e+00> : vector<8x512xf32>
    %176 = tpu.matmul %174, %175, %cst_70 {dimension_numbers = #tpu.dot_dimension_numbers<[1], [0], [0], [1], [0, 0, 1, 1], [], []>} : vector<8x64xf32>, vector<64x512xf32>, vector<8x512xf32> -> vector<8x512xf32>
    %c0_71 = arith.constant 0 : index
    %c0_72 = arith.constant 0 : index
    %177 = vector.load %arg4[%c0_71, %c0_72] : memref<128x512xf32, #tpu.memory_space<vmem>>, vector<128x512xf32>
    %cst_73 = arith.constant dense<0.000000e+00> : vector<8x512xf32>
    %178 = tpu.matmul %172, %177, %cst_73 {dimension_numbers = #tpu.dot_dimension_numbers<[1], [0], [0], [1], [0, 0, 1, 1], [], []>} : vector<8x128xf32>, vector<128x512xf32>, vector<8x512xf32> -> vector<8x512xf32>
    %179 = arith.addf %176, %178 : vector<8x512xf32>
    %180 = arith.addf %179, %2 : vector<8x512xf32>
    %181 = vector.extract_strided_slice %180 {offsets = [0, 0], sizes = [8, 384], strides = [1, 1]} : vector<8x512xf32> to vector<8x384xf32>
    %182 = arith.negf %181 : vector<8x384xf32>
    %183 = math.exp %182 : vector<8x384xf32>
    %cst_74 = arith.constant 1.000000e+00 : f32
    %184 = vector.broadcast %cst_74 : f32 to vector<8x384xf32>
    %185 = arith.addf %184, %183 : vector<8x384xf32>
    %186 = arith.divf %184, %185 : vector<8x384xf32>
    %187 = vector.extract_strided_slice %180 {offsets = [0, 384], sizes = [8, 128], strides = [1, 1]} : vector<8x512xf32> to vector<8x128xf32>
    %188 = math.tanh %187 : vector<8x128xf32>
    %189 = vector.extract_strided_slice %186 {offsets = [0, 0], sizes = [8, 128], strides = [1, 1]} : vector<8x384xf32> to vector<8x128xf32>
    %190 = vector.extract_strided_slice %186 {offsets = [0, 128], sizes = [8, 128], strides = [1, 1]} : vector<8x384xf32> to vector<8x128xf32>
    %191 = vector.extract_strided_slice %186 {offsets = [0, 256], sizes = [8, 128], strides = [1, 1]} : vector<8x384xf32> to vector<8x128xf32>
    %192 = arith.mulf %190, %170 : vector<8x128xf32>
    %193 = arith.mulf %189, %188 : vector<8x128xf32>
    %194 = arith.addf %192, %193 : vector<8x128xf32>
    %195 = math.tanh %194 : vector<8x128xf32>
    %196 = arith.mulf %191, %195 : vector<8x128xf32>
    %c0_75 = arith.constant 0 : index
    %c0_76 = arith.constant 0 : index
    %197 = vector.load %arg5[%c0_75, %c0_76] : memref<128x256xf32, #tpu.memory_space<vmem>>, vector<128x256xf32>
    %cst_77 = arith.constant dense<0.000000e+00> : vector<8x256xf32>
    %198 = tpu.matmul %196, %197, %cst_77 {dimension_numbers = #tpu.dot_dimension_numbers<[1], [0], [0], [1], [0, 0, 1, 1], [], []>} : vector<8x128xf32>, vector<128x256xf32>, vector<8x256xf32> -> vector<8x256xf32>
    %c0_78 = arith.constant 0 : index
    %c0_79 = arith.constant 0 : index
    %199 = vector.load %arg6[%c0_78, %c0_79] : memref<1x256xf32, #tpu.memory_space<vmem>>, vector<1x256xf32>
    %200 = vector.broadcast %199 : vector<1x256xf32> to vector<8x256xf32>
    %201 = arith.addf %198, %200 : vector<8x256xf32>
    %cst_80 = arith.constant 0.000000e+00 : f32
    %202 = vector.broadcast %cst_80 : f32 to vector<8x256xf32>
    %203 = arith.maximumf %201, %202 : vector<8x256xf32>
    %c0_81 = arith.constant 0 : index
    %c0_82 = arith.constant 0 : index
    %204 = vector.load %arg7[%c0_81, %c0_82] : memref<256x128xf32, #tpu.memory_space<vmem>>, vector<256x128xf32>
    %cst_83 = arith.constant dense<0.000000e+00> : vector<8x128xf32>
    %205 = tpu.matmul %203, %204, %cst_83 {dimension_numbers = #tpu.dot_dimension_numbers<[1], [0], [0], [1], [0, 0, 1, 1], [], []>} : vector<8x256xf32>, vector<256x128xf32>, vector<8x128xf32> -> vector<8x128xf32>
    %c0_84 = arith.constant 0 : index
    %c0_85 = arith.constant 0 : index
    %206 = vector.load %arg8[%c0_84, %c0_85] : memref<1x128xf32, #tpu.memory_space<vmem>>, vector<1x128xf32>
    %207 = vector.broadcast %206 : vector<1x128xf32> to vector<8x128xf32>
    %208 = arith.addf %205, %207 : vector<8x128xf32>
    %cst_86 = arith.constant 0.000000e+00 : f32
    %209 = vector.broadcast %cst_86 : f32 to vector<8x128xf32>
    %210 = arith.maximumf %208, %209 : vector<8x128xf32>
    %c0_87 = arith.constant 0 : index
    %c0_88 = arith.constant 0 : index
    %211 = vector.load %arg9[%c0_87, %c0_88] : memref<128x128xf32, #tpu.memory_space<vmem>>, vector<128x128xf32>
    %cst_89 = arith.constant dense<0.000000e+00> : vector<8x128xf32>
    %212 = tpu.matmul %210, %211, %cst_89 {dimension_numbers = #tpu.dot_dimension_numbers<[1], [0], [0], [1], [0, 0, 1, 1], [], []>} : vector<8x128xf32>, vector<128x128xf32>, vector<8x128xf32> -> vector<8x128xf32>
    %c0_90 = arith.constant 0 : index
    %c0_91 = arith.constant 0 : index
    %213 = vector.load %arg10[%c0_90, %c0_91] : memref<1x128xf32, #tpu.memory_space<vmem>>, vector<1x128xf32>
    %214 = vector.broadcast %213 : vector<1x128xf32> to vector<8x128xf32>
    %215 = arith.addf %212, %214 : vector<8x128xf32>
    %c0_92 = arith.constant 0 : index
    %c0_93 = arith.constant 0 : index
    %216 = vector.load %arg11[%c0_92, %c0_93] : memref<8x128xf32, #tpu.memory_space<vmem>>, vector<8x128xf32>
    tpu.vector_store %arg11[%c0_92, %c0_93], %215 {strides = array<i32>} : memref<8x128xf32, #tpu.memory_space<vmem>>, vector<8x128xf32>,
    %217 = tpu.concatenate %196, %194 in 1 : vector<8x128xf32>, vector<8x128xf32> -> vector<8x256xf32>
    %c0_94 = arith.constant 0 : index
    %c0_95 = arith.constant 0 : index
    %218 = vector.load %arg12[%c0_94, %c0_95] : memref<8x256xf32, #tpu.memory_space<vmem>>, vector<8x256xf32>
    tpu.vector_store %arg12[%c0_94, %c0_95], %217 {strides = array<i32>} : memref<8x256xf32, #tpu.memory_space<vmem>>, vector<8x256xf32>,
    return
  }
  func.func @transform_0(%arg0: i32) -> (i32, i32, i32) {
    %c0_i32 = arith.constant 0 : i32
    %c0_i32_0 = arith.constant 0 : i32
    %c0_i32_1 = arith.constant 0 : i32
    return %c0_i32, %arg0, %c0_i32_0 : i32, i32, i32
  }
  func.func @transform_1(%arg0: i32) -> (i32, i32) {
    %c0_i32 = arith.constant 0 : i32
    %c0_i32_0 = arith.constant 0 : i32
    %c0_i32_1 = arith.constant 0 : i32
    return %c0_i32, %c0_i32_0 : i32, i32
  }
  func.func @transform_2(%arg0: i32) -> (i32, i32) {
    %c0_i32 = arith.constant 0 : i32
    %c0_i32_0 = arith.constant 0 : i32
    %c0_i32_1 = arith.constant 0 : i32
    return %c0_i32, %c0_i32_0 : i32, i32
  }
  func.func @transform_3(%arg0: i32) -> (i32, i32) {
    %c0_i32 = arith.constant 0 : i32
    %c0_i32_0 = arith.constant 0 : i32
    %c0_i32_1 = arith.constant 0 : i32
    return %c0_i32, %c0_i32_0 : i32, i32
  }
  func.func @transform_4(%arg0: i32) -> (i32, i32) {
    %c0_i32 = arith.constant 0 : i32
    %c0_i32_0 = arith.constant 0 : i32
    %c0_i32_1 = arith.constant 0 : i32
    return %c0_i32, %c0_i32_0 : i32, i32
  }
  func.func @transform_5(%arg0: i32) -> (i32, i32) {
    %c0_i32 = arith.constant 0 : i32
    %c0_i32_0 = arith.constant 0 : i32
    %c0_i32_1 = arith.constant 0 : i32
    return %c0_i32, %c0_i32_0 : i32, i32
  }
  func.func @transform_6(%arg0: i32) -> (i32, i32) {
    %c0_i32 = arith.constant 0 : i32
    %c0_i32_0 = arith.constant 0 : i32
    %c0_i32_1 = arith.constant 0 : i32
    return %c0_i32, %c0_i32_0 : i32, i32
  }
  func.func @transform_7(%arg0: i32) -> (i32, i32) {
    %c0_i32 = arith.constant 0 : i32
    %c0_i32_0 = arith.constant 0 : i32
    %c0_i32_1 = arith.constant 0 : i32
    return %c0_i32, %c0_i32_0 : i32, i32
  }
  func.func @transform_8(%arg0: i32) -> (i32, i32) {
    %c0_i32 = arith.constant 0 : i32
    %c0_i32_0 = arith.constant 0 : i32
    %c0_i32_1 = arith.constant 0 : i32
    return %c0_i32, %c0_i32_0 : i32, i32
  }
  func.func @transform_9(%arg0: i32) -> (i32, i32) {
    %c0_i32 = arith.constant 0 : i32
    %c0_i32_0 = arith.constant 0 : i32
    %c0_i32_1 = arith.constant 0 : i32
    return %c0_i32, %c0_i32_0 : i32, i32
  }
  func.func @transform_10(%arg0: i32) -> (i32, i32) {
    %c0_i32 = arith.constant 0 : i32
    %c0_i32_0 = arith.constant 0 : i32
    return %arg0, %c0_i32 : i32, i32
  }
  func.func @transform_11(%arg0: i32) -> (i32, i32) {
    %c0_i32 = arith.constant 0 : i32
    %c0_i32_0 = arith.constant 0 : i32
    return %arg0, %c0_i32 : i32, i32
  }
}

</mosaic_0001>

<llo_original>
// kernel: lstm_actor_forward.1
$region0: #{lstm_actor_forward.1}
  #allocation0 [shape = 'u32[]', space=smem, size = 0x4, offset = 0x4, fixed_abs, tag = 'smem constant byte address 0x4 - core index']
  #allocation1 [shape = 'u32[72,128]{1,0:T(1,128)}', space=vmem, size = 0x9000, scoped, tag = 'internal scratch']
  %s0 = inlined_call_operand.vmem [shape: f32[8,8,64], index: 0, kind: input, shape index: {}]
  %s1 = inlined_call_operand.vmem [shape: f32[64,512], index: 1, kind: input, shape index: {}]
  %s2 = inlined_call_operand.vmem [shape: f32[1,512], index: 2, kind: input, shape index: {}]
  %s3 = inlined_call_operand.vmem [shape: f32[128,512], index: 3, kind: input, shape index: {}]
  %s4 = inlined_call_operand.vmem [shape: f32[128,256], index: 4, kind: input, shape index: {}]
  %s5 = inlined_call_operand.vmem [shape: f32[1,256], index: 5, kind: input, shape index: {}]
  %s6 = inlined_call_operand.vmem [shape: f32[256,128], index: 6, kind: input, shape index: {}]
  %s7 = inlined_call_operand.vmem [shape: f32[1,128], index: 7, kind: input, shape index: {}]
  %s8 = inlined_call_operand.vmem [shape: f32[128,128], index: 8, kind: input, shape index: {}]
  %s9 = inlined_call_operand.vmem [shape: f32[1,128], index: 9, kind: input, shape index: {}]
  %s10 = inlined_call_operand.vmem [shape: f32[8,128], index: 10, kind: output, shape index: {0}]
  %s11 = inlined_call_operand.vmem [shape: f32[8,256], index: 11, kind: output, shape index: {1}]
  %12 = xla_tuple %s10, %s11
  %s13 = sld [smem:[#allocation0]]
  $region58: #{lstm_actor_forward.1} parent=0
    _
  %s15 = ssub.s32 1, %s13
  %s16 = scalar_select 0, %s15, %s13
  // Predicated region
  $region2: #{lstm_actor_forward.1} parent=0 // pred_check
    _
  $region3: #{lstm_actor_forward.1} parent=0 // pred_check_branch
    %18 = sbr.rel (0) target = $region5
  $region4: #{lstm_actor_forward.1} parent=0 // pred_region
    _
  $region5: #{lstm_actor_forward.1} parent=0 // pred_fallthru
    _
  // Predicated region
  $region6: #{lstm_actor_forward.1} parent=0 // pred_check
    _
  $region7: #{lstm_actor_forward.1} parent=0 // pred_check_branch
    %20 = sbr.rel (0) target = $region9
  $region8: #{lstm_actor_forward.1} parent=0 // pred_region
    _
  $region9: #{lstm_actor_forward.1} parent=0 // pred_fallthru
    _
  // Predicated region
  $region10: #{lstm_actor_forward.1} parent=0 // pred_check
    _
  $region11: #{lstm_actor_forward.1} parent=0 // pred_check_branch
    %22 = sbr.rel (0) target = $region13
  $region12: #{lstm_actor_forward.1} parent=0 // pred_region
    _
  $region13: #{lstm_actor_forward.1} parent=0 // pred_fallthru
    _
  // Predicated region
  $region14: #{lstm_actor_forward.1} parent=0 // pred_check
    _
  $region15: #{lstm_actor_forward.1} parent=0 // pred_check_branch
    %24 = sbr.rel (0) target = $region17
  $region16: #{lstm_actor_forward.1} parent=0 // pred_region
    _
  $region17: #{lstm_actor_forward.1} parent=0 // pred_fallthru
    _
  // Predicated region
  $region18: #{lstm_actor_forward.1} parent=0 // pred_check
    _
  $region19: #{lstm_actor_forward.1} parent=0 // pred_check_branch
    %26 = sbr.rel (0) target = $region21
  $region20: #{lstm_actor_forward.1} parent=0 // pred_region
    _
  $region21: #{lstm_actor_forward.1} parent=0 // pred_fallthru
    _
  // Predicated region
  $region22: #{lstm_actor_forward.1} parent=0 // pred_check
    _
  $region23: #{lstm_actor_forward.1} parent=0 // pred_check_branch
    %28 = sbr.rel (0) target = $region25
  $region24: #{lstm_actor_forward.1} parent=0 // pred_region
    _
  $region25: #{lstm_actor_forward.1} parent=0 // pred_fallthru
    _
  // Predicated region
  $region26: #{lstm_actor_forward.1} parent=0 // pred_check
    _
  $region27: #{lstm_actor_forward.1} parent=0 // pred_check_branch
    %30 = sbr.rel (0) target = $region29
  $region28: #{lstm_actor_forward.1} parent=0 // pred_region
    _
  $region29: #{lstm_actor_forward.1} parent=0 // pred_fallthru
    _
  // Predicated region
  $region30: #{lstm_actor_forward.1} parent=0 // pred_check
    _
  $region31: #{lstm_actor_forward.1} parent=0 // pred_check_branch
    %32 = sbr.rel (0) target = $region33
  $region32: #{lstm_actor_forward.1} parent=0 // pred_region
    _
  $region33: #{lstm_actor_forward.1} parent=0 // pred_fallthru
    _
  // Predicated region
  $region34: #{lstm_actor_forward.1} parent=0 // pred_check
    _
  $region35: #{lstm_actor_forward.1} parent=0 // pred_check_branch
    %34 = sbr.rel (0) target = $region37
  $region36: #{lstm_actor_forward.1} parent=0 // pred_region
    _
  $region37: #{lstm_actor_forward.1} parent=0 // pred_fallthru
    _
  // Predicated region
  $region38: #{lstm_actor_forward.1} parent=0 // pred_check
    _
  $region39: #{lstm_actor_forward.1} parent=0 // pred_check_branch
    %36 = sbr.rel (0) target = $region41
  $region40: #{lstm_actor_forward.1} parent=0 // pred_region
    _
  $region41: #{lstm_actor_forward.1} parent=0 // pred_fallthru
    _
  %v37 = vld [vmem:[%s2] sm:$0xf]
  %v39 = vperm.slane %v37, 0
  %v40 = vperm.slane %v37, 1
  %v41 = vperm.slane %v37, 2
  %v42 = vperm.slane %v37, 3
  %v47 = vld [vmem:[%s0] sm:$0xff]
  %v48 = vld [vmem:[%s1] sm:$0xff]
  %v49 = vld [vmem:[%s1 + $0x8] sm:$0xff]
  %v50 = vld [vmem:[%s1 + $0x10] sm:$0xff]
  %v51 = vld [vmem:[%s1 + $0x18] sm:$0xff]
  %v52 = vld [vmem:[%s1 + $0x20] sm:$0xff]
  %v53 = vld [vmem:[%s1 + $0x28] sm:$0xff]
  %v54 = vld [vmem:[%s1 + $0x30] sm:$0xff]
  %v55 = vld [vmem:[%s1 + $0x38] sm:$0xff]
  %v56 = vld [vmem:[%s1 + $0x40] sm:$0xff]
  %v57 = vld [vmem:[%s1 + $0x48] sm:$0xff]
  %v58 = vld [vmem:[%s1 + $0x50] sm:$0xff]
  %v59 = vld [vmem:[%s1 + $0x58] sm:$0xff]
  %v60 = vld [vmem:[%s1 + $0x60] sm:$0xff]
  %v61 = vld [vmem:[%s1 + $0x68] sm:$0xff]
  %v62 = vld [vmem:[%s1 + $0x70] sm:$0xff]
  %v63 = vld [vmem:[%s1 + $0x78] sm:$0xff]
  %v64 = vld [vmem:[%s1 + $0x80] sm:$0xff]
  %v65 = vld [vmem:[%s1 + $0x88] sm:$0xff]
  %v66 = vld [vmem:[%s1 + $0x90] sm:$0xff]
  %v67 = vld [vmem:[%s1 + $0x98] sm:$0xff]
  %v68 = vld [vmem:[%s1 + $0xa0] sm:$0xff]
  %v69 = vld [vmem:[%s1 + $0xa8] sm:$0xff]
  %v70 = vld [vmem:[%s1 + $0xb0] sm:$0xff]
  %v71 = vld [vmem:[%s1 + $0xb8] sm:$0xff]
  %v72 = vld [vmem:[%s1 + $0xc0] sm:$0xff]
  %v73 = vld [vmem:[%s1 + $0xc8] sm:$0xff]
  %v74 = vld [vmem:[%s1 + $0xd0] sm:$0xff]
  %v75 = vld [vmem:[%s1 + $0xd8] sm:$0xff]
  %v76 = vld [vmem:[%s1 + $0xe0] sm:$0xff]
  %v77 = vld [vmem:[%s1 + $0xe8] sm:$0xff]
  %v78 = vld [vmem:[%s1 + $0xf0] sm:$0xff]
  %v79 = vld [vmem:[%s1 + $0xf8] sm:$0xff]
  %v80 = vld [vmem:[%s3] sm:$0xff]
  %v81 = vld [vmem:[%s3 + $0x8] sm:$0xff]
  %v82 = vld [vmem:[%s3 + $0x10] sm:$0xff]
  %v83 = vld [vmem:[%s3 + $0x18] sm:$0xff]
  %v84 = vld [vmem:[%s3 + $0x20] sm:$0xff]
  %v85 = vld [vmem:[%s3 + $0x28] sm:$0xff]
  %v86 = vld [vmem:[%s3 + $0x30] sm:$0xff]
  %v87 = vld [vmem:[%s3 + $0x38] sm:$0xff]
  %v88 = vld [vmem:[%s3 + $0x40] sm:$0xff]
  %v89 = vld [vmem:[%s3 + $0x48] sm:$0xff]
  %v90 = vld [vmem:[%s3 + $0x50] sm:$0xff]
  %v91 = vld [vmem:[%s3 + $0x58] sm:$0xff]
  %v92 = vld [vmem:[%s3 + $0x60] sm:$0xff]
  %v93 = vld [vmem:[%s3 + $0x68] sm:$0xff]
  %v94 = vld [vmem:[%s3 + $0x70] sm:$0xff]
  %v95 = vld [vmem:[%s3 + $0x78] sm:$0xff]
  %v96 = vld [vmem:[%s3 + $0x80] sm:$0xff]
  %v97 = vld [vmem:[%s3 + $0x88] sm:$0xff]
  %v98 = vld [vmem:[%s3 + $0x90] sm:$0xff]
  %v99 = vld [vmem:[%s3 + $0x98] sm:$0xff]
  %v100 = vld [vmem:[%s3 + $0xa0] sm:$0xff]
  %v101 = vld [vmem:[%s3 + $0xa8] sm:$0xff]
  %v102 = vld [vmem:[%s3 + $0xb0] sm:$0xff]
  %v103 = vld [vmem:[%s3 + $0xb8] sm:$0xff]
  %v104 = vld [vmem:[%s3 + $0xc0] sm:$0xff]
  %v105 = vld [vmem:[%s3 + $0xc8] sm:$0xff]
  %v106 = vld [vmem:[%s3 + $0xd0] sm:$0xff]
  %v107 = vld [vmem:[%s3 + $0xd8] sm:$0xff]
  %v108 = vld [vmem:[%s3 + $0xe0] sm:$0xff]
  %v109 = vld [vmem:[%s3 + $0xe8] sm:$0xff]
  %v110 = vld [vmem:[%s3 + $0xf0] sm:$0xff]
  %v111 = vld [vmem:[%s3 + $0xf8] sm:$0xff]
  %v112 = vld [vmem:[%s3 + $0x100] sm:$0xff]
  %v113 = vld [vmem:[%s3 + $0x108] sm:$0xff]
  %v114 = vld [vmem:[%s3 + $0x110] sm:$0xff]
  %v115 = vld [vmem:[%s3 + $0x118] sm:$0xff]
  %v116 = vld [vmem:[%s3 + $0x120] sm:$0xff]
  %v117 = vld [vmem:[%s3 + $0x128] sm:$0xff]
  %v118 = vld [vmem:[%s3 + $0x130] sm:$0xff]
  %v119 = vld [vmem:[%s3 + $0x138] sm:$0xff]
  %v120 = vld [vmem:[%s3 + $0x140] sm:$0xff]
  %v121 = vld [vmem:[%s3 + $0x148] sm:$0xff]
  %v122 = vld [vmem:[%s3 + $0x150] sm:$0xff]
  %v123 = vld [vmem:[%s3 + $0x158] sm:$0xff]
  %v124 = vld [vmem:[%s3 + $0x160] sm:$0xff]
  %v125 = vld [vmem:[%s3 + $0x168] sm:$0xff]
  %v126 = vld [vmem:[%s3 + $0x170] sm:$0xff]
  %v127 = vld [vmem:[%s3 + $0x178] sm:$0xff]
  %v128 = vld [vmem:[%s3 + $0x180] sm:$0xff]
  %v129 = vld [vmem:[%s3 + $0x188] sm:$0xff]
  %v130 = vld [vmem:[%s3 + $0x190] sm:$0xff]
  %v131 = vld [vmem:[%s3 + $0x198] sm:$0xff]
  %v132 = vld [vmem:[%s3 + $0x1a0] sm:$0xff]
  %v133 = vld [vmem:[%s3 + $0x1a8] sm:$0xff]
  %v134 = vld [vmem:[%s3 + $0x1b0] sm:$0xff]
  %v135 = vld [vmem:[%s3 + $0x1b8] sm:$0xff]
  %v136 = vld [vmem:[%s3 + $0x1c0] sm:$0xff]
  %v137 = vld [vmem:[%s3 + $0x1c8] sm:$0xff]
  %v138 = vld [vmem:[%s3 + $0x1d0] sm:$0xff]
  %v139 = vld [vmem:[%s3 + $0x1d8] sm:$0xff]
  %v140 = vld [vmem:[%s3 + $0x1e0] sm:$0xff]
  %v141 = vld [vmem:[%s3 + $0x1e8] sm:$0xff]
  %v142 = vld [vmem:[%s3 + $0x1f0] sm:$0xff]
  %v143 = vld [vmem:[%s3 + $0x1f8] sm:$0xff]
  %144 = vmatpush.msra.mxu0 %v140
  %145 = vmatpush.msra.mxu0 %v136
  %146 = vmatpush.msra.mxu0 %v132
  %147 = vmatpush.msra.mxu0 %v128
  %148 = vmatpush.msra.mxu0 %v124
  %149 = vmatpush.msra.mxu0 %v120
  %150 = vmatpush.msra.mxu0 %v116
  %151 = vmatpush.msra.mxu0 %v112
  %152 = vmatpush.msra.mxu0 %v108
  %153 = vmatpush.msra.mxu0 %v104
  %154 = vmatpush.msra.mxu0 %v100
  %155 = vmatpush.msra.mxu0 %v96
  %156 = vmatpush.msra.mxu0 %v92
  %157 = vmatpush.msra.mxu0 %v88
  %158 = vmatpush.msra.mxu0 %v84
  %159 = vmatpush.msra.mxu0 %v80
  %160 = vmatmul.f32.gmra.mxu0 0.0
  %v161 = vpop.f32.mrf.mxu0
  %v162 = vadd.f32 0.0, %v161
  %163 = vdwg.mxu0
  %164 = vmatpush.msra.mxu0 %v141
  %165 = vmatpush.msra.mxu0 %v137
  %166 = vmatpush.msra.mxu0 %v133
  %167 = vmatpush.msra.mxu0 %v129
  %168 = vmatpush.msra.mxu0 %v125
  %169 = vmatpush.msra.mxu0 %v121
  %170 = vmatpush.msra.mxu0 %v117
  %171 = vmatpush.msra.mxu0 %v113
  %172 = vmatpush.msra.mxu0 %v109
  %173 = vmatpush.msra.mxu0 %v105
  %174 = vmatpush.msra.mxu0 %v101
  %175 = vmatpush.msra.mxu0 %v97
  %176 = vmatpush.msra.mxu0 %v93
  %177 = vmatpush.msra.mxu0 %v89
  %178 = vmatpush.msra.mxu0 %v85
  %179 = vmatpush.msra.mxu0 %v81
  %180 = vmatmul.f32.gmra.mxu0 0.0
  %v181 = vpop.f32.mrf.mxu0
  %v182 = vadd.f32 0.0, %v181
  %183 = vdwg.mxu0
  %184 = vmatpush.msra.mxu0 %v142
  %185 = vmatpush.msra.mxu0 %v138
  %186 = vmatpush.msra.mxu0 %v134
  %187 = vmatpush.msra.mxu0 %v130
  %188 = vmatpush.msra.mxu0 %v126
  %189 = vmatpush.msra.mxu0 %v122
  %190 = vmatpush.msra.mxu0 %v118
  %191 = vmatpush.msra.mxu0 %v114
  %192 = vmatpush.msra.mxu0 %v110
  %193 = vmatpush.msra.mxu0 %v106
  %194 = vmatpush.msra.mxu0 %v102
  %195 = vmatpush.msra.mxu0 %v98
  %196 = vmatpush.msra.mxu0 %v94
  %197 = vmatpush.msra.mxu0 %v90
  %198 = vmatpush.msra.mxu0 %v86
  %199 = vmatpush.msra.mxu0 %v82
  %200 = vmatmul.f32.gmra.mxu0 0.0
  %v201 = vpop.f32.mrf.mxu0
  %v202 = vadd.f32 0.0, %v201
  %203 = vdwg.mxu0
  %204 = vmatpush.msra.mxu0 %v143
  %205 = vmatpush.msra.mxu0 %v139
  %206 = vmatpush.msra.mxu0 %v135
  %207 = vmatpush.msra.mxu0 %v131
  %208 = vmatpush.msra.mxu0 %v127
  %209 = vmatpush.msra.mxu0 %v123
  %210 = vmatpush.msra.mxu0 %v119
  %211 = vmatpush.msra.mxu0 %v115
  %212 = vmatpush.msra.mxu0 %v111
  %213 = vmatpush.msra.mxu0 %v107
  %214 = vmatpush.msra.mxu0 %v103
  %215 = vmatpush.msra.mxu0 %v99
  %216 = vmatpush.msra.mxu0 %v95
  %217 = vmatpush.msra.mxu0 %v91
  %218 = vmatpush.msra.mxu0 %v87
  %219 = vmatpush.msra.mxu0 %v83
  %220 = vmatmul.f32.gmra.mxu0 0.0
  %v221 = vpop.f32.mrf.mxu0
  %v222 = vadd.f32 0.0, %v221
  %223 = vdwg.mxu0
  %vm224 = vcmask 523264
  %v226 = vsel %vm224, %v47, 0
  %228 = vmatpush.msra.mxu0 0.0
  %229 = vmatpush.msra.mxu0 0.0
  %230 = vmatpush.msra.mxu0 0.0
  %231 = vmatpush.msra.mxu0 0.0
  %232 = vmatpush.msra.mxu0 0.0
  %233 = vmatpush.msra.mxu0 0.0
  %234 = vmatpush.msra.mxu0 0.0
  %235 = vmatpush.msra.mxu0 0.0
  %236 = vmatpush.msra.mxu0 %v76
  %237 = vmatpush.msra.mxu0 %v72
  %238 = vmatpush.msra.mxu0 %v68
  %239 = vmatpush.msra.mxu0 %v64
  %240 = vmatpush.msra.mxu0 %v60
  %241 = vmatpush.msra.mxu0 %v56
  %242 = vmatpush.msra.mxu0 %v52
  %243 = vmatpush.msra.mxu0 %v48
  %244 = vmatmul.f32.gmra.mxu0 %v226
  %v245 = vpop.f32.mrf.mxu0
  %v246 = vadd.f32 %v162, %v245
  %247 = vdwg.mxu0
  %248 = vmatpush.msra.mxu0 0.0
  %249 = vmatpush.msra.mxu0 0.0
  %250 = vmatpush.msra.mxu0 0.0
  %251 = vmatpush.msra.mxu0 0.0
  %252 = vmatpush.msra.mxu0 0.0
  %253 = vmatpush.msra.mxu0 0.0
  %254 = vmatpush.msra.mxu0 0.0
  %255 = vmatpush.msra.mxu0 0.0
  %256 = vmatpush.msra.mxu0 %v77
  %257 = vmatpush.msra.mxu0 %v73
  %258 = vmatpush.msra.mxu0 %v69
  %259 = vmatpush.msra.mxu0 %v65
  %260 = vmatpush.msra.mxu0 %v61
  %261 = vmatpush.msra.mxu0 %v57
  %262 = vmatpush.msra.mxu0 %v53
  %263 = vmatpush.msra.mxu0 %v49
  %264 = vmatmul.f32.gmra.mxu0 %v226
  %v265 = vpop.f32.mrf.mxu0
  %v266 = vadd.f32 %v182, %v265
  %267 = vdwg.mxu0
  %268 = vmatpush.msra.mxu0 0.0
  %269 = vmatpush.msra.mxu0 0.0
  %270 = vmatpush.msra.mxu0 0.0
  %271 = vmatpush.msra.mxu0 0.0
  %272 = vmatpush.msra.mxu0 0.0
  %273 = vmatpush.msra.mxu0 0.0
  %274 = vmatpush.msra.mxu0 0.0
  %275 = vmatpush.msra.mxu0 0.0
  %276 = vmatpush.msra.mxu0 %v78
  %277 = vmatpush.msra.mxu0 %v74
  %278 = vmatpush.msra.mxu0 %v70
  %279 = vmatpush.msra.mxu0 %v66
  %280 = vmatpush.msra.mxu0 %v62
  %281 = vmatpush.msra.mxu0 %v58
  %282 = vmatpush.msra.mxu0 %v54
  %283 = vmatpush.msra.mxu0 %v50
  %284 = vmatmul.f32.gmra.mxu0 %v226
  %v285 = vpop.f32.mrf.mxu0
  %v286 = vadd.f32 %v202, %v285
  %287 = vdwg.mxu0
  %288 = vmatpush.msra.mxu0 0.0
  %289 = vmatpush.msra.mxu0 0.0
  %290 = vmatpush.msra.mxu0 0.0
  %291 = vmatpush.msra.mxu0 0.0
  %292 = vmatpush.msra.mxu0 0.0
  %293 = vmatpush.msra.mxu0 0.0
  %294 = vmatpush.msra.mxu0 0.0
  %295 = vmatpush.msra.mxu0 0.0
  %296 = vmatpush.msra.mxu0 %v79
  %297 = vmatpush.msra.mxu0 %v75
  %298 = vmatpush.msra.mxu0 %v71
  %299 = vmatpush.msra.mxu0 %v67
  %300 = vmatpush.msra.mxu0 %v63
  %301 = vmatpush.msra.mxu0 %v59
  %302 = vmatpush.msra.mxu0 %v55
  %303 = vmatpush.msra.mxu0 %v51
  %304 = vmatmul.f32.gmra.mxu0 %v226
  %v305 = vpop.f32.mrf.mxu0
  %v306 = vadd.f32 %v222, %v305
  %307 = vdwg.mxu0
  %v308 = vadd.f32 %v246, %v39
  %v309 = vadd.f32 %v266, %v40
  %v310 = vadd.f32 %v286, %v41
  %v311 = vadd.f32 %v306, %v42
  %v312 = vxor.u32 %v308, 2147483648
  %v313 = vxor.u32 %v309, 2147483648
  %v314 = vxor.u32 %v310, 2147483648
  %v315 = vmul.f32 %v312, 1.442695
  %v316 = vpow.pop %v315
  %v317 = vmul.f32 %v313, 1.442695
  %v318 = vpow.pop %v317
  %v319 = vmul.f32 %v314, 1.442695
  %v320 = vpow.pop %v319
  %v321 = vadd.f32 %v316, 1.0
  %v322 = vadd.f32 %v318, 1.0
  %v323 = vadd.f32 %v320, 1.0
  %v324 = vrcp.pop %v321
  %v325 = vmul.f32 %v321, %v324
  %v326 = vsub.f32 1.0, %v325
  %v327 = vmul.f32 %v324, %v326
  %v328 = vadd.f32 %v324, %v327
  %vm329 = vweird.f32 %v321
  %vm330 = vweird.f32 %v324
  %vm331 = vmor %vm329, %vm330
  %v332 = vsel %vm331, %v324, %v328
  %v333 = vand.u32 2147483647, %v321
  %vm334 = vcmp.eq.f32.partialorder %v333, 8.507059e+37
  %v335 = vand.u32 %v321, 2147483648
  %v336 = vor.u32 1.1754944e-38, %v335
  %v337 = vsel %vm334, %v336, %v332
  %v338 = vmul.f32 1.0, %v337
  %v339 = vrcp.pop %v322
  %v340 = vmul.f32 %v322, %v339
  %v341 = vsub.f32 1.0, %v340
  %v342 = vmul.f32 %v339, %v341
  %v343 = vadd.f32 %v339, %v342
  %vm344 = vweird.f32 %v322
  %vm345 = vweird.f32 %v339
  %vm346 = vmor %vm344, %vm345
  %v347 = vsel %vm346, %v339, %v343
  %v348 = vand.u32 2147483647, %v322
  %vm349 = vcmp.eq.f32.partialorder %v348, 8.507059e+37
  %v350 = vand.u32 %v322, 2147483648
  %v351 = vor.u32 1.1754944e-38, %v350
  %v352 = vsel %vm349, %v351, %v347
  %v353 = vmul.f32 1.0, %v352
  %v354 = vrcp.pop %v323
  %v355 = vmul.f32 %v323, %v354
  %v356 = vsub.f32 1.0, %v355
  %v357 = vmul.f32 %v354, %v356
  %v358 = vadd.f32 %v354, %v357
  %vm359 = vweird.f32 %v323
  %vm360 = vweird.f32 %v354
  %vm361 = vmor %vm359, %vm360
  %v362 = vsel %vm361, %v354, %v358
  %v363 = vand.u32 2147483647, %v323
  %vm364 = vcmp.eq.f32.partialorder %v363, 8.507059e+37
  %v365 = vand.u32 %v323, 2147483648
  %v366 = vor.u32 1.1754944e-38, %v365
  %v367 = vsel %vm364, %v366, %v362
  %v368 = vmul.f32 1.0, %v367
  %v369 = vtanh.pop %v311
  %v370 = vmul.f32 %v353, 0.0
  %v371 = vmul.f32 %v338, %v369
  %v372 = vadd.f32 %v370, %v371
  %v373 = vtanh.pop %v372
  %v374 = vmul.f32 %v368, %v373
  %s375 = scalar_lea.vmem %s0, 8
  %v376 = vld [vmem:[%s375] sm:$0xff]
  %377 = vmatpush.msra.mxu0 %v140
  %378 = vmatpush.msra.mxu0 %v136
  %379 = vmatpush.msra.mxu0 %v132
  %380 = vmatpush.msra.mxu0 %v128
  %381 = vmatpush.msra.mxu0 %v124
  %382 = vmatpush.msra.mxu0 %v120
  %383 = vmatpush.msra.mxu0 %v116
  %384 = vmatpush.msra.mxu0 %v112
  %385 = vmatpush.msra.mxu0 %v108
  %386 = vmatpush.msra.mxu0 %v104
  %387 = vmatpush.msra.mxu0 %v100
  %388 = vmatpush.msra.mxu0 %v96
  %389 = vmatpush.msra.mxu0 %v92
  %390 = vmatpush.msra.mxu0 %v88
  %391 = vmatpush.msra.mxu0 %v84
  %392 = vmatpush.msra.mxu0 %v80
  %393 = vmatmul.f32.gmra.mxu0 %v374
  %v394 = vpop.f32.mrf.mxu0
  %v395 = vadd.f32 0.0, %v394
  %396 = vdwg.mxu0
  %397 = vmatpush.msra.mxu0 %v141
  %398 = vmatpush.msra.mxu0 %v137
  %399 = vmatpush.msra.mxu0 %v133
  %400 = vmatpush.msra.mxu0 %v129
  %401 = vmatpush.msra.mxu0 %v125
  %402 = vmatpush.msra.mxu0 %v121
  %403 = vmatpush.msra.mxu0 %v117
  %404 = vmatpush.msra.mxu0 %v113
  %405 = vmatpush.msra.mxu0 %v109
  %406 = vmatpush.msra.mxu0 %v105
  %407 = vmatpush.msra.mxu0 %v101
  %408 = vmatpush.msra.mxu0 %v97
  %409 = vmatpush.msra.mxu0 %v93
  %410 = vmatpush.msra.mxu0 %v89
  %411 = vmatpush.msra.mxu0 %v85
  %412 = vmatpush.msra.mxu0 %v81
  %413 = vmatmul.f32.gmra.mxu0 %v374
  %v414 = vpop.f32.mrf.mxu0
  %v415 = vadd.f32 0.0, %v414
  %416 = vdwg.mxu0
  %417 = vmatpush.msra.mxu0 %v142
  %418 = vmatpush.msra.mxu0 %v138
  %419 = vmatpush.msra.mxu0 %v134
  %420 = vmatpush.msra.mxu0 %v130
  %421 = vmatpush.msra.mxu0 %v126
  %422 = vmatpush.msra.mxu0 %v122
  %423 = vmatpush.msra.mxu0 %v118
  %424 = vmatpush.msra.mxu0 %v114
  %425 = vmatpush.msra.mxu0 %v110
  %426 = vmatpush.msra.mxu0 %v106
  %427 = vmatpush.msra.mxu0 %v102
  %428 = vmatpush.msra.mxu0 %v98
  %429 = vmatpush.msra.mxu0 %v94
  %430 = vmatpush.msra.mxu0 %v90
  %431 = vmatpush.msra.mxu0 %v86
  %432 = vmatpush.msra.mxu0 %v82
  %433 = vmatmul.f32.gmra.mxu0 %v374
  %v434 = vpop.f32.mrf.mxu0
  %v435 = vadd.f32 0.0, %v434
  %436 = vdwg.mxu0
  %437 = vmatpush.msra.mxu0 %v143
  %438 = vmatpush.msra.mxu0 %v139
  %439 = vmatpush.msra.mxu0 %v135
  %440 = vmatpush.msra.mxu0 %v131
  %441 = vmatpush.msra.mxu0 %v127
  %442 = vmatpush.msra.mxu0 %v123
  %443 = vmatpush.msra.mxu0 %v119
  %444 = vmatpush.msra.mxu0 %v115
  %445 = vmatpush.msra.mxu0 %v111
  %446 = vmatpush.msra.mxu0 %v107
  %447 = vmatpush.msra.mxu0 %v103
  %448 = vmatpush.msra.mxu0 %v99
  %449 = vmatpush.msra.mxu0 %v95
  %450 = vmatpush.msra.mxu0 %v91
  %451 = vmatpush.msra.mxu0 %v87
  %452 = vmatpush.msra.mxu0 %v83
  %453 = vmatmul.f32.gmra.mxu0 %v374
  %v454 = vpop.f32.mrf.mxu0
  %v455 = vadd.f32 0.0, %v454
  %456 = vdwg.mxu0
  %v458 = vsel %vm224, %v376, 0
  %460 = vmatpush.msra.mxu0 0.0
  %461 = vmatpush.msra.mxu0 0.0
  %462 = vmatpush.msra.mxu0 0.0
  %463 = vmatpush.msra.mxu0 0.0
  %464 = vmatpush.msra.mxu0 0.0
  %465 = vmatpush.msra.mxu0 0.0
  %466 = vmatpush.msra.mxu0 0.0
  %467 = vmatpush.msra.mxu0 0.0
  %468 = vmatpush.msra.mxu0 %v76
  %469 = vmatpush.msra.mxu0 %v72
  %470 = vmatpush.msra.mxu0 %v68
  %471 = vmatpush.msra.mxu0 %v64
  %472 = vmatpush.msra.mxu0 %v60
  %473 = vmatpush.msra.mxu0 %v56
  %474 = vmatpush.msra.mxu0 %v52
  %475 = vmatpush.msra.mxu0 %v48
  %476 = vmatmul.f32.gmra.mxu0 %v458
  %v477 = vpop.f32.mrf.mxu0
  %v478 = vadd.f32 %v395, %v477
  %479 = vdwg.mxu0
  %480 = vmatpush.msra.mxu0 0.0
  %481 = vmatpush.msra.mxu0 0.0
  %482 = vmatpush.msra.mxu0 0.0
  %483 = vmatpush.msra.mxu0 0.0
  %484 = vmatpush.msra.mxu0 0.0
  %485 = vmatpush.msra.mxu0 0.0
  %486 = vmatpush.msra.mxu0 0.0
  %487 = vmatpush.msra.mxu0 0.0
  %488 = vmatpush.msra.mxu0 %v77
  %489 = vmatpush.msra.mxu0 %v73
  %490 = vmatpush.msra.mxu0 %v69
  %491 = vmatpush.msra.mxu0 %v65
  %492 = vmatpush.msra.mxu0 %v61
  %493 = vmatpush.msra.mxu0 %v57
  %494 = vmatpush.msra.mxu0 %v53
  %495 = vmatpush.msra.mxu0 %v49
  %496 = vmatmul.f32.gmra.mxu0 %v458
  %v497 = vpop.f32.mrf.mxu0
  %v498 = vadd.f32 %v415, %v497
  %499 = vdwg.mxu0
  %500 = vmatpush.msra.mxu0 0.0
  %501 = vmatpush.msra.mxu0 0.0
  %502 = vmatpush.msra.mxu0 0.0
  %503 = vmatpush.msra.mxu0 0.0
  %504 = vmatpush.msra.mxu0 0.0
  %505 = vmatpush.msra.mxu0 0.0
  %506 = vmatpush.msra.mxu0 0.0
  %507 = vmatpush.msra.mxu0 0.0
  %508 = vmatpush.msra.mxu0 %v78
  %509 = vmatpush.msra.mxu0 %v74
  %510 = vmatpush.msra.mxu0 %v70
  %511 = vmatpush.msra.mxu0 %v66
  %512 = vmatpush.msra.mxu0 %v62
  %513 = vmatpush.msra.mxu0 %v58
  %514 = vmatpush.msra.mxu0 %v54
  %515 = vmatpush.msra.mxu0 %v50
  %516 = vmatmul.f32.gmra.mxu0 %v458
  %v517 = vpop.f32.mrf.mxu0
  %v518 = vadd.f32 %v435, %v517
  %519 = vdwg.mxu0
  %520 = vmatpush.msra.mxu0 0.0
  %521 = vmatpush.msra.mxu0 0.0
  %522 = vmatpush.msra.mxu0 0.0
  %523 = vmatpush.msra.mxu0 0.0
  %524 = vmatpush.msra.mxu0 0.0
  %525 = vmatpush.msra.mxu0 0.0
  %526 = vmatpush.msra.mxu0 0.0
  %527 = vmatpush.msra.mxu0 0.0
  %528 = vmatpush.msra.mxu0 %v79
  %529 = vmatpush.msra.mxu0 %v75
  %530 = vmatpush.msra.mxu0 %v71
  %531 = vmatpush.msra.mxu0 %v67
  %532 = vmatpush.msra.mxu0 %v63
  %533 = vmatpush.msra.mxu0 %v59
  %534 = vmatpush.msra.mxu0 %v55
  %535 = vmatpush.msra.mxu0 %v51
  %536 = vmatmul.f32.gmra.mxu0 %v458
  %v537 = vpop.f32.mrf.mxu0
  %v538 = vadd.f32 %v455, %v537
  %539 = vdwg.mxu0
  %v540 = vadd.f32 %v478, %v39
  %v541 = vadd.f32 %v498, %v40
  %v542 = vadd.f32 %v518, %v41
  %v543 = vadd.f32 %v538, %v42
  %v544 = vxor.u32 %v540, 2147483648
  %v545 = vxor.u32 %v541, 2147483648
  %v546 = vxor.u32 %v542, 2147483648
  %v547 = vmul.f32 %v544, 1.442695
  %v548 = vpow.pop %v547
  %v549 = vmul.f32 %v545, 1.442695
  %v550 = vpow.pop %v549
  %v551 = vmul.f32 %v546, 1.442695
  %v552 = vpow.pop %v551
  %v553 = vadd.f32 %v548, 1.0
  %v554 = vadd.f32 %v550, 1.0
  %v555 = vadd.f32 %v552, 1.0
  %v556 = vrcp.pop %v553
  %v557 = vmul.f32 %v553, %v556
  %v558 = vsub.f32 1.0, %v557
  %v559 = vmul.f32 %v556, %v558
  %v560 = vadd.f32 %v556, %v559
  %vm561 = vweird.f32 %v553
  %vm562 = vweird.f32 %v556
  %vm563 = vmor %vm561, %vm562
  %v564 = vsel %vm563, %v556, %v560
  %v565 = vand.u32 2147483647, %v553
  %vm566 = vcmp.eq.f32.partialorder %v565, 8.507059e+37
  %v567 = vand.u32 %v553, 2147483648
  %v568 = vor.u32 1.1754944e-38, %v567
  %v569 = vsel %vm566, %v568, %v564
  %v570 = vmul.f32 1.0, %v569
  %v571 = vrcp.pop %v554
  %v572 = vmul.f32 %v554, %v571
  %v573 = vsub.f32 1.0, %v572
  %v574 = vmul.f32 %v571, %v573
  %v575 = vadd.f32 %v571, %v574
  %vm576 = vweird.f32 %v554
  %vm577 = vweird.f32 %v571
  %vm578 = vmor %vm576, %vm577
  %v579 = vsel %vm578, %v571, %v575
  %v580 = vand.u32 2147483647, %v554
  %vm581 = vcmp.eq.f32.partialorder %v580, 8.507059e+37
  %v582 = vand.u32 %v554, 2147483648
  %v583 = vor.u32 1.1754944e-38, %v582
  %v584 = vsel %vm581, %v583, %v579
  %v585 = vmul.f32 1.0, %v584
  %v586 = vrcp.pop %v555
  %v587 = vmul.f32 %v555, %v586
  %v588 = vsub.f32 1.0, %v587
  %v589 = vmul.f32 %v586, %v588
  %v590 = vadd.f32 %v586, %v589
  %vm591 = vweird.f32 %v555
  %vm592 = vweird.f32 %v586
  %vm593 = vmor %vm591, %vm592
  %v594 = vsel %vm593, %v586, %v590
  %v595 = vand.u32 2147483647, %v555
  %vm596 = vcmp.eq.f32.partialorder %v595, 8.507059e+37
  %v597 = vand.u32 %v555, 2147483648
  %v598 = vor.u32 1.1754944e-38, %v597
  %v599 = vsel %vm596, %v598, %v594
  %v600 = vmul.f32 1.0, %v599
  %v601 = vtanh.pop %v543
  %v602 = vmul.f32 %v585, %v372
  %v603 = vmul.f32 %v570, %v601
  %v604 = vadd.f32 %v602, %v603
  %v605 = vtanh.pop %v604
  %v606 = vmul.f32 %v600, %v605
  %s607 = scalar_lea.vmem %s0, 16
  %v608 = vld [vmem:[%s607] sm:$0xff]
  %609 = vmatpush.msra.mxu0 %v140
  %610 = vmatpush.msra.mxu0 %v136
  %611 = vmatpush.msra.mxu0 %v132
  %612 = vmatpush.msra.mxu0 %v128
  %613 = vmatpush.msra.mxu0 %v124
  %614 = vmatpush.msra.mxu0 %v120
  %615 = vmatpush.msra.mxu0 %v116
  %616 = vmatpush.msra.mxu0 %v112
  %617 = vmatpush.msra.mxu0 %v108
  %618 = vmatpush.msra.mxu0 %v104
  %619 = vmatpush.msra.mxu0 %v100
  %620 = vmatpush.msra.mxu0 %v96
  %621 = vmatpush.msra.mxu0 %v92
  %622 = vmatpush.msra.mxu0 %v88
  %623 = vmatpush.msra.mxu0 %v84
  %624 = vmatpush.msra.mxu0 %v80
  %625 = vmatmul.f32.gmra.mxu0 %v606
  %v626 = vpop.f32.mrf.mxu0
  %v627 = vadd.f32 0.0, %v626
  %628 = vdwg.mxu0
  %629 = vmatpush.msra.mxu0 %v141
  %630 = vmatpush.msra.mxu0 %v137
  %631 = vmatpush.msra.mxu0 %v133
  %632 = vmatpush.msra.mxu0 %v129
  %633 = vmatpush.msra.mxu0 %v125
  %634 = vmatpush.msra.mxu0 %v121
  %635 = vmatpush.msra.mxu0 %v117
  %636 = vmatpush.msra.mxu0 %v113
  %637 = vmatpush.msra.mxu0 %v109
  %638 = vmatpush.msra.mxu0 %v105
  %639 = vmatpush.msra.mxu0 %v101
  %640 = vmatpush.msra.mxu0 %v97
  %641 = vmatpush.msra.mxu0 %v93
  %642 = vmatpush.msra.mxu0 %v89
  %643 = vmatpush.msra.mxu0 %v85
  %644 = vmatpush.msra.mxu0 %v81
  %645 = vmatmul.f32.gmra.mxu0 %v606
  %v646 = vpop.f32.mrf.mxu0
  %v647 = vadd.f32 0.0, %v646
  %648 = vdwg.mxu0
  %649 = vmatpush.msra.mxu0 %v142
  %650 = vmatpush.msra.mxu0 %v138
  %651 = vmatpush.msra.mxu0 %v134
  %652 = vmatpush.msra.mxu0 %v130
  %653 = vmatpush.msra.mxu0 %v126
  %654 = vmatpush.msra.mxu0 %v122
  %655 = vmatpush.msra.mxu0 %v118
  %656 = vmatpush.msra.mxu0 %v114
  %657 = vmatpush.msra.mxu0 %v110
  %658 = vmatpush.msra.mxu0 %v106
  %659 = vmatpush.msra.mxu0 %v102
  %660 = vmatpush.msra.mxu0 %v98
  %661 = vmatpush.msra.mxu0 %v94
  %662 = vmatpush.msra.mxu0 %v90
  %663 = vmatpush.msra.mxu0 %v86
  %664 = vmatpush.msra.mxu0 %v82
  %665 = vmatmul.f32.gmra.mxu0 %v606
  %v666 = vpop.f32.mrf.mxu0
  %v667 = vadd.f32 0.0, %v666
  %668 = vdwg.mxu0
  %669 = vmatpush.msra.mxu0 %v143
  %670 = vmatpush.msra.mxu0 %v139
  %671 = vmatpush.msra.mxu0 %v135
  %672 = vmatpush.msra.mxu0 %v131
  %673 = vmatpush.msra.mxu0 %v127
  %674 = vmatpush.msra.mxu0 %v123
  %675 = vmatpush.msra.mxu0 %v119
  %676 = vmatpush.msra.mxu0 %v115
  %677 = vmatpush.msra.mxu0 %v111
  %678 = vmatpush.msra.mxu0 %v107
  %679 = vmatpush.msra.mxu0 %v103
  %680 = vmatpush.msra.mxu0 %v99
  %681 = vmatpush.msra.mxu0 %v95
  %682 = vmatpush.msra.mxu0 %v91
  %683 = vmatpush.msra.mxu0 %v87
  %684 = vmatpush.msra.mxu0 %v83
  %685 = vmatmul.f32.gmra.mxu0 %v606
  %v686 = vpop.f32.mrf.mxu0
  %v687 = vadd.f32 0.0, %v686
  %688 = vdwg.mxu0
  %v690 = vsel %vm224, %v608, 0
  %692 = vmatpush.msra.mxu0 0.0
  %693 = vmatpush.msra.mxu0 0.0
  %694 = vmatpush.msra.mxu0 0.0
  %695 = vmatpush.msra.mxu0 0.0
  %696 = vmatpush.msra.mxu0 0.0
  %697 = vmatpush.msra.mxu0 0.0
  %698 = vmatpush.msra.mxu0 0.0
  %699 = vmatpush.msra.mxu0 0.0
  %700 = vmatpush.msra.mxu0 %v76
  %701 = vmatpush.msra.mxu0 %v72
  %702 = vmatpush.msra.mxu0 %v68
  %703 = vmatpush.msra.mxu0 %v64
  %704 = vmatpush.msra.mxu0 %v60
  %705 = vmatpush.msra.mxu0 %v56
  %706 = vmatpush.msra.mxu0 %v52
  %707 = vmatpush.msra.mxu0 %v48
  %708 = vmatmul.f32.gmra.mxu0 %v690
  %v709 = vpop.f32.mrf.mxu0
  %v710 = vadd.f32 %v627, %v709
  %711 = vdwg.mxu0
  %712 = vmatpush.msra.mxu0 0.0
  %713 = vmatpush.msra.mxu0 0.0
  %714 = vmatpush.msra.mxu0 0.0
  %715 = vmatpush.msra.mxu0 0.0
  %716 = vmatpush.msra.mxu0 0.0
  %717 = vmatpush.msra.mxu0 0.0
  %718 = vmatpush.msra.mxu0 0.0
  %719 = vmatpush.msra.mxu0 0.0
  %720 = vmatpush.msra.mxu0 %v77
  %721 = vmatpush.msra.mxu0 %v73
  %722 = vmatpush.msra.mxu0 %v69
  %723 = vmatpush.msra.mxu0 %v65
  %724 = vmatpush.msra.mxu0 %v61
  %725 = vmatpush.msra.mxu0 %v57
  %726 = vmatpush.msra.mxu0 %v53
  %727 = vmatpush.msra.mxu0 %v49
  %728 = vmatmul.f32.gmra.mxu0 %v690
  %v729 = vpop.f32.mrf.mxu0
  %v730 = vadd.f32 %v647, %v729
  %731 = vdwg.mxu0
  %732 = vmatpush.msra.mxu0 0.0
  %733 = vmatpush.msra.mxu0 0.0
  %734 = vmatpush.msra.mxu0 0.0
  %735 = vmatpush.msra.mxu0 0.0
  %736 = vmatpush.msra.mxu0 0.0
  %737 = vmatpush.msra.mxu0 0.0
  %738 = vmatpush.msra.mxu0 0.0
  %739 = vmatpush.msra.mxu0 0.0
  %740 = vmatpush.msra.mxu0 %v78
  %741 = vmatpush.msra.mxu0 %v74
  %742 = vmatpush.msra.mxu0 %v70
  %743 = vmatpush.msra.mxu0 %v66
  %744 = vmatpush.msra.mxu0 %v62
  %745 = vmatpush.msra.mxu0 %v58
  %746 = vmatpush.msra.mxu0 %v54
  %747 = vmatpush.msra.mxu0 %v50
  %748 = vmatmul.f32.gmra.mxu0 %v690
  %v749 = vpop.f32.mrf.mxu0
  %v750 = vadd.f32 %v667, %v749
  %751 = vdwg.mxu0
  %752 = vmatpush.msra.mxu0 0.0
  %753 = vmatpush.msra.mxu0 0.0
  %754 = vmatpush.msra.mxu0 0.0
  %755 = vmatpush.msra.mxu0 0.0
  %756 = vmatpush.msra.mxu0 0.0
  %757 = vmatpush.msra.mxu0 0.0
  %758 = vmatpush.msra.mxu0 0.0
  %759 = vmatpush.msra.mxu0 0.0
  %760 = vmatpush.msra.mxu0 %v79
  %761 = vmatpush.msra.mxu0 %v75
  %762 = vmatpush.msra.mxu0 %v71
  %763 = vmatpush.msra.mxu0 %v67
  %764 = vmatpush.msra.mxu0 %v63
  %765 = vmatpush.msra.mxu0 %v59
  %766 = vmatpush.msra.mxu0 %v55
  %767 = vmatpush.msra.mxu0 %v51
  %768 = vmatmul.f32.gmra.mxu0 %v690
  %v769 = vpop.f32.mrf.mxu0
  %v770 = vadd.f32 %v687, %v769
  %771 = vdwg.mxu0
  %v772 = vadd.f32 %v710, %v39
  %v773 = vadd.f32 %v730, %v40
  %v774 = vadd.f32 %v750, %v41
  %v775 = vadd.f32 %v770, %v42
  %v776 = vxor.u32 %v772, 2147483648
  %v777 = vxor.u32 %v773, 2147483648
  %v778 = vxor.u32 %v774, 2147483648
  %v779 = vmul.f32 %v776, 1.442695
  %v780 = vpow.pop %v779
  %v781 = vmul.f32 %v777, 1.442695
  %v782 = vpow.pop %v781
  %v783 = vmul.f32 %v778, 1.442695
  %v784 = vpow.pop %v783
  %v785 = vadd.f32 %v780, 1.0
  %v786 = vadd.f32 %v782, 1.0
  %v787 = vadd.f32 %v784, 1.0
  %v788 = vrcp.pop %v785
  %v789 = vmul.f32 %v785, %v788
  %v790 = vsub.f32 1.0, %v789
  %v791 = vmul.f32 %v788, %v790
  %v792 = vadd.f32 %v788, %v791
  %vm793 = vweird.f32 %v785
  %vm794 = vweird.f32 %v788
  %vm795 = vmor %vm793, %vm794
  %v796 = vsel %vm795, %v788, %v792
  %v797 = vand.u32 2147483647, %v785
  %vm798 = vcmp.eq.f32.partialorder %v797, 8.507059e+37
  %v799 = vand.u32 %v785, 2147483648
  %v800 = vor.u32 1.1754944e-38, %v799
  %v801 = vsel %vm798, %v800, %v796
  %v802 = vmul.f32 1.0, %v801
  %v803 = vrcp.pop %v786
  %v804 = vmul.f32 %v786, %v803
  %v805 = vsub.f32 1.0, %v804
  %v806 = vmul.f32 %v803, %v805
  %v807 = vadd.f32 %v803, %v806
  %vm808 = vweird.f32 %v786
  %vm809 = vweird.f32 %v803
  %vm810 = vmor %vm808, %vm809
  %v811 = vsel %vm810, %v803, %v807
  %v812 = vand.u32 2147483647, %v786
  %vm813 = vcmp.eq.f32.partialorder %v812, 8.507059e+37
  %v814 = vand.u32 %v786, 2147483648
  %v815 = vor.u32 1.1754944e-38, %v814
  %v816 = vsel %vm813, %v815, %v811
  %v817 = vmul.f32 1.0, %v816
  %v818 = vrcp.pop %v787
  %v819 = vmul.f32 %v787, %v818
  %v820 = vsub.f32 1.0, %v819
  %v821 = vmul.f32 %v818, %v820
  %v822 = vadd.f32 %v818, %v821
  %vm823 = vweird.f32 %v787
  %vm824 = vweird.f32 %v818
  %vm825 = vmor %vm823, %vm824
  %v826 = vsel %vm825, %v818, %v822
  %v827 = vand.u32 2147483647, %v787
  %vm828 = vcmp.eq.f32.partialorder %v827, 8.507059e+37
  %v829 = vand.u32 %v787, 2147483648
  %v830 = vor.u32 1.1754944e-38, %v829
  %v831 = vsel %vm828, %v830, %v826
  %v832 = vmul.f32 1.0, %v831
  %v833 = vtanh.pop %v775
  %v834 = vmul.f32 %v817, %v604
  %v835 = vmul.f32 %v802, %v833
  %v836 = vadd.f32 %v834, %v835
  %v837 = vtanh.pop %v836
  %v838 = vmul.f32 %v832, %v837
  %s839 = scalar_lea.vmem %s0, 24
  %v840 = vld [vmem:[%s839] sm:$0xff]
  %841 = vmatpush.msra.mxu0 %v140
  %842 = vmatpush.msra.mxu0 %v136
  %843 = vmatpush.msra.mxu0 %v132
  %844 = vmatpush.msra.mxu0 %v128
  %845 = vmatpush.msra.mxu0 %v124
  %846 = vmatpush.msra.mxu0 %v120
  %847 = vmatpush.msra.mxu0 %v116
  %848 = vmatpush.msra.mxu0 %v112
  %849 = vmatpush.msra.mxu0 %v108
  %850 = vmatpush.msra.mxu0 %v104
  %851 = vmatpush.msra.mxu0 %v100
  %852 = vmatpush.msra.mxu0 %v96
  %853 = vmatpush.msra.mxu0 %v92
  %854 = vmatpush.msra.mxu0 %v88
  %855 = vmatpush.msra.mxu0 %v84
  %856 = vmatpush.msra.mxu0 %v80
  %857 = vmatmul.f32.gmra.mxu0 %v838
  %v858 = vpop.f32.mrf.mxu0
  %v859 = vadd.f32 0.0, %v858
  %860 = vdwg.mxu0
  %861 = vmatpush.msra.mxu0 %v141
  %862 = vmatpush.msra.mxu0 %v137
  %863 = vmatpush.msra.mxu0 %v133
  %864 = vmatpush.msra.mxu0 %v129
  %865 = vmatpush.msra.mxu0 %v125
  %866 = vmatpush.msra.mxu0 %v121
  %867 = vmatpush.msra.mxu0 %v117
  %868 = vmatpush.msra.mxu0 %v113
  %869 = vmatpush.msra.mxu0 %v109
  %870 = vmatpush.msra.mxu0 %v105
  %871 = vmatpush.msra.mxu0 %v101
  %872 = vmatpush.msra.mxu0 %v97
  %873 = vmatpush.msra.mxu0 %v93
  %874 = vmatpush.msra.mxu0 %v89
  %875 = vmatpush.msra.mxu0 %v85
  %876 = vmatpush.msra.mxu0 %v81
  %877 = vmatmul.f32.gmra.mxu0 %v838
  %v878 = vpop.f32.mrf.mxu0
  %v879 = vadd.f32 0.0, %v878
  %880 = vdwg.mxu0
  %881 = vmatpush.msra.mxu0 %v142
  %882 = vmatpush.msra.mxu0 %v138
  %883 = vmatpush.msra.mxu0 %v134
  %884 = vmatpush.msra.mxu0 %v130
  %885 = vmatpush.msra.mxu0 %v126
  %886 = vmatpush.msra.mxu0 %v122
  %887 = vmatpush.msra.mxu0 %v118
  %888 = vmatpush.msra.mxu0 %v114
  %889 = vmatpush.msra.mxu0 %v110
  %890 = vmatpush.msra.mxu0 %v106
  %891 = vmatpush.msra.mxu0 %v102
  %892 = vmatpush.msra.mxu0 %v98
  %893 = vmatpush.msra.mxu0 %v94
  %894 = vmatpush.msra.mxu0 %v90
  %895 = vmatpush.msra.mxu0 %v86
  %896 = vmatpush.msra.mxu0 %v82
  %897 = vmatmul.f32.gmra.mxu0 %v838
  %v898 = vpop.f32.mrf.mxu0
  %v899 = vadd.f32 0.0, %v898
  %900 = vdwg.mxu0
  %901 = vmatpush.msra.mxu0 %v143
  %902 = vmatpush.msra.mxu0 %v139
  %903 = vmatpush.msra.mxu0 %v135
  %904 = vmatpush.msra.mxu0 %v131
  %905 = vmatpush.msra.mxu0 %v127
  %906 = vmatpush.msra.mxu0 %v123
  %907 = vmatpush.msra.mxu0 %v119
  %908 = vmatpush.msra.mxu0 %v115
  %909 = vmatpush.msra.mxu0 %v111
  %910 = vmatpush.msra.mxu0 %v107
  %911 = vmatpush.msra.mxu0 %v103
  %912 = vmatpush.msra.mxu0 %v99
  %913 = vmatpush.msra.mxu0 %v95
  %914 = vmatpush.msra.mxu0 %v91
  %915 = vmatpush.msra.mxu0 %v87
  %916 = vmatpush.msra.mxu0 %v83
  %917 = vmatmul.f32.gmra.mxu0 %v838
  %v918 = vpop.f32.mrf.mxu0
  %v919 = vadd.f32 0.0, %v918
  %920 = vdwg.mxu0
  %v922 = vsel %vm224, %v840, 0
  %924 = vmatpush.msra.mxu0 0.0
  %925 = vmatpush.msra.mxu0 0.0
  %926 = vmatpush.msra.mxu0 0.0
  %927 = vmatpush.msra.mxu0 0.0
  %928 = vmatpush.msra.mxu0 0.0
  %929 = vmatpush.msra.mxu0 0.0
  %930 = vmatpush.msra.mxu0 0.0
  %931 = vmatpush.msra.mxu0 0.0
  %932 = vmatpush.msra.mxu0 %v76
  %933 = vmatpush.msra.mxu0 %v72
  %934 = vmatpush.msra.mxu0 %v68
  %935 = vmatpush.msra.mxu0 %v64
  %936 = vmatpush.msra.mxu0 %v60
  %937 = vmatpush.msra.mxu0 %v56
  %938 = vmatpush.msra.mxu0 %v52
  %939 = vmatpush.msra.mxu0 %v48
  %940 = vmatmul.f32.gmra.mxu0 %v922
  %v941 = vpop.f32.mrf.mxu0
  %v942 = vadd.f32 %v859, %v941
  %943 = vdwg.mxu0
  %944 = vmatpush.msra.mxu0 0.0
  %945 = vmatpush.msra.mxu0 0.0
  %946 = vmatpush.msra.mxu0 0.0
  %947 = vmatpush.msra.mxu0 0.0
  %948 = vmatpush.msra.mxu0 0.0
  %949 = vmatpush.msra.mxu0 0.0
  %950 = vmatpush.msra.mxu0 0.0
  %951 = vmatpush.msra.mxu0 0.0
  %952 = vmatpush.msra.mxu0 %v77
  %953 = vmatpush.msra.mxu0 %v73
  %954 = vmatpush.msra.mxu0 %v69
  %955 = vmatpush.msra.mxu0 %v65
  %956 = vmatpush.msra.mxu0 %v61
  %957 = vmatpush.msra.mxu0 %v57
  %958 = vmatpush.msra.mxu0 %v53
  %959 = vmatpush.msra.mxu0 %v49
  %960 = vmatmul.f32.gmra.mxu0 %v922
  %v961 = vpop.f32.mrf.mxu0
  %v962 = vadd.f32 %v879, %v961
  %963 = vdwg.mxu0
  %964 = vmatpush.msra.mxu0 0.0
  %965 = vmatpush.msra.mxu0 0.0
  %966 = vmatpush.msra.mxu0 0.0
  %967 = vmatpush.msra.mxu0 0.0
  %968 = vmatpush.msra.mxu0 0.0
  %969 = vmatpush.msra.mxu0 0.0
  %970 = vmatpush.msra.mxu0 0.0
  %971 = vmatpush.msra.mxu0 0.0
  %972 = vmatpush.msra.mxu0 %v78
  %973 = vmatpush.msra.mxu0 %v74
  %974 = vmatpush.msra.mxu0 %v70
  %975 = vmatpush.msra.mxu0 %v66
  %976 = vmatpush.msra.mxu0 %v62
  %977 = vmatpush.msra.mxu0 %v58
  %978 = vmatpush.msra.mxu0 %v54
  %979 = vmatpush.msra.mxu0 %v50
  %980 = vmatmul.f32.gmra.mxu0 %v922
  %v981 = vpop.f32.mrf.mxu0
  %v982 = vadd.f32 %v899, %v981
  %983 = vdwg.mxu0
  %984 = vmatpush.msra.mxu0 0.0
  %985 = vmatpush.msra.mxu0 0.0
  %986 = vmatpush.msra.mxu0 0.0
  %987 = vmatpush.msra.mxu0 0.0
  %988 = vmatpush.msra.mxu0 0.0
  %989 = vmatpush.msra.mxu0 0.0
  %990 = vmatpush.msra.mxu0 0.0
  %991 = vmatpush.msra.mxu0 0.0
  %992 = vmatpush.msra.mxu0 %v79
  %993 = vmatpush.msra.mxu0 %v75
  %994 = vmatpush.msra.mxu0 %v71
  %995 = vmatpush.msra.mxu0 %v67
  %996 = vmatpush.msra.mxu0 %v63
  %997 = vmatpush.msra.mxu0 %v59
  %998 = vmatpush.msra.mxu0 %v55
  %999 = vmatpush.msra.mxu0 %v51
  %1000 = vmatmul.f32.gmra.mxu0 %v922
  %v1001 = vpop.f32.mrf.mxu0
  %v1002 = vadd.f32 %v919, %v1001
  %1003 = vdwg.mxu0
  %v1004 = vadd.f32 %v942, %v39
  %v1005 = vadd.f32 %v962, %v40
  %v1006 = vadd.f32 %v982, %v41
  %v1007 = vadd.f32 %v1002, %v42
  %v1008 = vxor.u32 %v1004, 2147483648
  %v1009 = vxor.u32 %v1005, 2147483648
  %v1010 = vxor.u32 %v1006, 2147483648
  %v1011 = vmul.f32 %v1008, 1.442695
  %v1012 = vpow.pop %v1011
  %v1013 = vmul.f32 %v1009, 1.442695
  %v1014 = vpow.pop %v1013
  %v1015 = vmul.f32 %v1010, 1.442695
  %v1016 = vpow.pop %v1015
  %v1017 = vadd.f32 %v1012, 1.0
  %v1018 = vadd.f32 %v1014, 1.0
  %v1019 = vadd.f32 %v1016, 1.0
  %v1020 = vrcp.pop %v1017
  %v1021 = vmul.f32 %v1017, %v1020
  %v1022 = vsub.f32 1.0, %v1021
  %v1023 = vmul.f32 %v1020, %v1022
  %v1024 = vadd.f32 %v1020, %v1023
  %vm1025 = vweird.f32 %v1017
  %vm1026 = vweird.f32 %v1020
  %vm1027 = vmor %vm1025, %vm1026
  %v1028 = vsel %vm1027, %v1020, %v1024
  %v1029 = vand.u32 2147483647, %v1017
  %vm1030 = vcmp.eq.f32.partialorder %v1029, 8.507059e+37
  %v1031 = vand.u32 %v1017, 2147483648
  %v1032 = vor.u32 1.1754944e-38, %v1031
  %v1033 = vsel %vm1030, %v1032, %v1028
  %v1034 = vmul.f32 1.0, %v1033
  %v1035 = vrcp.pop %v1018
  %v1036 = vmul.f32 %v1018, %v1035
  %v1037 = vsub.f32 1.0, %v1036
  %v1038 = vmul.f32 %v1035, %v1037
  %v1039 = vadd.f32 %v1035, %v1038
  %vm1040 = vweird.f32 %v1018
  %vm1041 = vweird.f32 %v1035
  %vm1042 = vmor %vm1040, %vm1041
  %v1043 = vsel %vm1042, %v1035, %v1039
  %v1044 = vand.u32 2147483647, %v1018
  %vm1045 = vcmp.eq.f32.partialorder %v1044, 8.507059e+37
  %v1046 = vand.u32 %v1018, 2147483648
  %v1047 = vor.u32 1.1754944e-38, %v1046
  %v1048 = vsel %vm1045, %v1047, %v1043
  %v1049 = vmul.f32 1.0, %v1048
  %v1050 = vrcp.pop %v1019
  %v1051 = vmul.f32 %v1019, %v1050
  %v1052 = vsub.f32 1.0, %v1051
  %v1053 = vmul.f32 %v1050, %v1052
  %v1054 = vadd.f32 %v1050, %v1053
  %vm1055 = vweird.f32 %v1019
  %vm1056 = vweird.f32 %v1050
  %vm1057 = vmor %vm1055, %vm1056
  %v1058 = vsel %vm1057, %v1050, %v1054
  %v1059 = vand.u32 2147483647, %v1019
  %vm1060 = vcmp.eq.f32.partialorder %v1059, 8.507059e+37
  %v1061 = vand.u32 %v1019, 2147483648
  %v1062 = vor.u32 1.1754944e-38, %v1061
  %v1063 = vsel %vm1060, %v1062, %v1058
  %v1064 = vmul.f32 1.0, %v1063
  %v1065 = vtanh.pop %v1007
  %v1066 = vmul.f32 %v1049, %v836
  %v1067 = vmul.f32 %v1034, %v1065
  %v1068 = vadd.f32 %v1066, %v1067
  %v1069 = vtanh.pop %v1068
  %v1070 = vmul.f32 %v1064, %v1069
  %s1071 = scalar_lea.vmem %s0, 32
  %v1072 = vld [vmem:[%s1071] sm:$0xff]
  %1073 = vmatpush.msra.mxu0 %v140
  %1074 = vmatpush.msra.mxu0 %v136
  %1075 = vmatpush.msra.mxu0 %v132
  %1076 = vmatpush.msra.mxu0 %v128
  %1077 = vmatpush.msra.mxu0 %v124
  %1078 = vmatpush.msra.mxu0 %v120
  %1079 = vmatpush.msra.mxu0 %v116
  %1080 = vmatpush.msra.mxu0 %v112
  %1081 = vmatpush.msra.mxu0 %v108
  %1082 = vmatpush.msra.mxu0 %v104
  %1083 = vmatpush.msra.mxu0 %v100
  %1084 = vmatpush.msra.mxu0 %v96
  %1085 = vmatpush.msra.mxu0 %v92
  %1086 = vmatpush.msra.mxu0 %v88
  %1087 = vmatpush.msra.mxu0 %v84
  %1088 = vmatpush.msra.mxu0 %v80
  %1089 = vmatmul.f32.gmra.mxu0 %v1070
  %v1090 = vpop.f32.mrf.mxu0
  %v1091 = vadd.f32 0.0, %v1090
  %1092 = vdwg.mxu0
  %1093 = vmatpush.msra.mxu0 %v141
  %1094 = vmatpush.msra.mxu0 %v137
  %1095 = vmatpush.msra.mxu0 %v133
  %1096 = vmatpush.msra.mxu0 %v129
  %1097 = vmatpush.msra.mxu0 %v125
  %1098 = vmatpush.msra.mxu0 %v121
  %1099 = vmatpush.msra.mxu0 %v117
  %1100 = vmatpush.msra.mxu0 %v113
  %1101 = vmatpush.msra.mxu0 %v109
  %1102 = vmatpush.msra.mxu0 %v105
  %1103 = vmatpush.msra.mxu0 %v101
  %1104 = vmatpush.msra.mxu0 %v97
  %1105 = vmatpush.msra.mxu0 %v93
  %1106 = vmatpush.msra.mxu0 %v89
  %1107 = vmatpush.msra.mxu0 %v85
  %1108 = vmatpush.msra.mxu0 %v81
  %1109 = vmatmul.f32.gmra.mxu0 %v1070
  %v1110 = vpop.f32.mrf.mxu0
  %v1111 = vadd.f32 0.0, %v1110
  %1112 = vdwg.mxu0
  %1113 = vmatpush.msra.mxu0 %v142
  %1114 = vmatpush.msra.mxu0 %v138
  %1115 = vmatpush.msra.mxu0 %v134
  %1116 = vmatpush.msra.mxu0 %v130
  %1117 = vmatpush.msra.mxu0 %v126
  %1118 = vmatpush.msra.mxu0 %v122
  %1119 = vmatpush.msra.mxu0 %v118
  %1120 = vmatpush.msra.mxu0 %v114
  %1121 = vmatpush.msra.mxu0 %v110
  %1122 = vmatpush.msra.mxu0 %v106
  %1123 = vmatpush.msra.mxu0 %v102
  %1124 = vmatpush.msra.mxu0 %v98
  %1125 = vmatpush.msra.mxu0 %v94
  %1126 = vmatpush.msra.mxu0 %v90
  %1127 = vmatpush.msra.mxu0 %v86
  %1128 = vmatpush.msra.mxu0 %v82
  %1129 = vmatmul.f32.gmra.mxu0 %v1070
  %v1130 = vpop.f32.mrf.mxu0
  %v1131 = vadd.f32 0.0, %v1130
  %1132 = vdwg.mxu0
  %1133 = vmatpush.msra.mxu0 %v143
  %1134 = vmatpush.msra.mxu0 %v139
  %1135 = vmatpush.msra.mxu0 %v135
  %1136 = vmatpush.msra.mxu0 %v131
  %1137 = vmatpush.msra.mxu0 %v127
  %1138 = vmatpush.msra.mxu0 %v123
  %1139 = vmatpush.msra.mxu0 %v119
  %1140 = vmatpush.msra.mxu0 %v115
  %1141 = vmatpush.msra.mxu0 %v111
  %1142 = vmatpush.msra.mxu0 %v107
  %1143 = vmatpush.msra.mxu0 %v103
  %1144 = vmatpush.msra.mxu0 %v99
  %1145 = vmatpush.msra.mxu0 %v95
  %1146 = vmatpush.msra.mxu0 %v91
  %1147 = vmatpush.msra.mxu0 %v87
  %1148 = vmatpush.msra.mxu0 %v83
  %1149 = vmatmul.f32.gmra.mxu0 %v1070
  %v1150 = vpop.f32.mrf.mxu0
  %v1151 = vadd.f32 0.0, %v1150
  %1152 = vdwg.mxu0
  %v1154 = vsel %vm224, %v1072, 0
  %1156 = vmatpush.msra.mxu0 0.0
  %1157 = vmatpush.msra.mxu0 0.0
  %1158 = vmatpush.msra.mxu0 0.0
  %1159 = vmatpush.msra.mxu0 0.0
  %1160 = vmatpush.msra.mxu0 0.0
  %1161 = vmatpush.msra.mxu0 0.0
  %1162 = vmatpush.msra.mxu0 0.0
  %1163 = vmatpush.msra.mxu0 0.0
  %1164 = vmatpush.msra.mxu0 %v76
  %1165 = vmatpush.msra.mxu0 %v72
  %1166 = vmatpush.msra.mxu0 %v68
  %1167 = vmatpush.msra.mxu0 %v64
  %1168 = vmatpush.msra.mxu0 %v60
  %1169 = vmatpush.msra.mxu0 %v56
  %1170 = vmatpush.msra.mxu0 %v52
  %1171 = vmatpush.msra.mxu0 %v48
  %1172 = vmatmul.f32.gmra.mxu0 %v1154
  %v1173 = vpop.f32.mrf.mxu0
  %v1174 = vadd.f32 %v1091, %v1173
  %1175 = vdwg.mxu0
  %1176 = vmatpush.msra.mxu0 0.0
  %1177 = vmatpush.msra.mxu0 0.0
  %1178 = vmatpush.msra.mxu0 0.0
  %1179 = vmatpush.msra.mxu0 0.0
  %1180 = vmatpush.msra.mxu0 0.0
  %1181 = vmatpush.msra.mxu0 0.0
  %1182 = vmatpush.msra.mxu0 0.0
  %1183 = vmatpush.msra.mxu0 0.0
  %1184 = vmatpush.msra.mxu0 %v77
  %1185 = vmatpush.msra.mxu0 %v73
  %1186 = vmatpush.msra.mxu0 %v69
  %1187 = vmatpush.msra.mxu0 %v65
  %1188 = vmatpush.msra.mxu0 %v61
  %1189 = vmatpush.msra.mxu0 %v57
  %1190 = vmatpush.msra.mxu0 %v53
  %1191 = vmatpush.msra.mxu0 %v49
  %1192 = vmatmul.f32.gmra.mxu0 %v1154
  %v1193 = vpop.f32.mrf.mxu0
  %v1194 = vadd.f32 %v1111, %v1193
  %1195 = vdwg.mxu0
  %1196 = vmatpush.msra.mxu0 0.0
  %1197 = vmatpush.msra.mxu0 0.0
  %1198 = vmatpush.msra.mxu0 0.0
  %1199 = vmatpush.msra.mxu0 0.0
  %1200 = vmatpush.msra.mxu0 0.0
  %1201 = vmatpush.msra.mxu0 0.0
  %1202 = vmatpush.msra.mxu0 0.0
  %1203 = vmatpush.msra.mxu0 0.0
  %1204 = vmatpush.msra.mxu0 %v78
  %1205 = vmatpush.msra.mxu0 %v74
  %1206 = vmatpush.msra.mxu0 %v70
  %1207 = vmatpush.msra.mxu0 %v66
  %1208 = vmatpush.msra.mxu0 %v62
  %1209 = vmatpush.msra.mxu0 %v58
  %1210 = vmatpush.msra.mxu0 %v54
  %1211 = vmatpush.msra.mxu0 %v50
  %1212 = vmatmul.f32.gmra.mxu0 %v1154
  %v1213 = vpop.f32.mrf.mxu0
  %v1214 = vadd.f32 %v1131, %v1213
  %1215 = vdwg.mxu0
  %1216 = vmatpush.msra.mxu0 0.0
  %1217 = vmatpush.msra.mxu0 0.0
  %1218 = vmatpush.msra.mxu0 0.0
  %1219 = vmatpush.msra.mxu0 0.0
  %1220 = vmatpush.msra.mxu0 0.0
  %1221 = vmatpush.msra.mxu0 0.0
  %1222 = vmatpush.msra.mxu0 0.0
  %1223 = vmatpush.msra.mxu0 0.0
  %1224 = vmatpush.msra.mxu0 %v79
  %1225 = vmatpush.msra.mxu0 %v75
  %1226 = vmatpush.msra.mxu0 %v71
  %1227 = vmatpush.msra.mxu0 %v67
  %1228 = vmatpush.msra.mxu0 %v63
  %1229 = vmatpush.msra.mxu0 %v59
  %1230 = vmatpush.msra.mxu0 %v55
  %1231 = vmatpush.msra.mxu0 %v51
  %1232 = vmatmul.f32.gmra.mxu0 %v1154
  %v1233 = vpop.f32.mrf.mxu0
  %v1234 = vadd.f32 %v1151, %v1233
  %1235 = vdwg.mxu0
  %v1236 = vadd.f32 %v1174, %v39
  %v1237 = vadd.f32 %v1194, %v40
  %v1238 = vadd.f32 %v1214, %v41
  %v1239 = vadd.f32 %v1234, %v42
  %v1240 = vxor.u32 %v1236, 2147483648
  %v1241 = vxor.u32 %v1237, 2147483648
  %v1242 = vxor.u32 %v1238, 2147483648
  %v1243 = vmul.f32 %v1240, 1.442695
  %v1244 = vpow.pop %v1243
  %v1245 = vmul.f32 %v1241, 1.442695
  %v1246 = vpow.pop %v1245
  %v1247 = vmul.f32 %v1242, 1.442695
  %v1248 = vpow.pop %v1247
  %v1249 = vadd.f32 %v1244, 1.0
  %v1250 = vadd.f32 %v1246, 1.0
  %v1251 = vadd.f32 %v1248, 1.0
  %v1252 = vrcp.pop %v1249
  %v1253 = vmul.f32 %v1249, %v1252
  %v1254 = vsub.f32 1.0, %v1253
  %v1255 = vmul.f32 %v1252, %v1254
  %v1256 = vadd.f32 %v1252, %v1255
  %vm1257 = vweird.f32 %v1249
  %vm1258 = vweird.f32 %v1252
  %vm1259 = vmor %vm1257, %vm1258
  %v1260 = vsel %vm1259, %v1252, %v1256
  %v1261 = vand.u32 2147483647, %v1249
  %vm1262 = vcmp.eq.f32.partialorder %v1261, 8.507059e+37
  %v1263 = vand.u32 %v1249, 2147483648
  %v1264 = vor.u32 1.1754944e-38, %v1263
  %v1265 = vsel %vm1262, %v1264, %v1260
  %v1266 = vmul.f32 1.0, %v1265
  %v1267 = vrcp.pop %v1250
  %v1268 = vmul.f32 %v1250, %v1267
  %v1269 = vsub.f32 1.0, %v1268
  %v1270 = vmul.f32 %v1267, %v1269
  %v1271 = vadd.f32 %v1267, %v1270
  %vm1272 = vweird.f32 %v1250
  %vm1273 = vweird.f32 %v1267
  %vm1274 = vmor %vm1272, %vm1273
  %v1275 = vsel %vm1274, %v1267, %v1271
  %v1276 = vand.u32 2147483647, %v1250
  %vm1277 = vcmp.eq.f32.partialorder %v1276, 8.507059e+37
  %v1278 = vand.u32 %v1250, 2147483648
  %v1279 = vor.u32 1.1754944e-38, %v1278
  %v1280 = vsel %vm1277, %v1279, %v1275
  %v1281 = vmul.f32 1.0, %v1280
  %v1282 = vrcp.pop %v1251
  %v1283 = vmul.f32 %v1251, %v1282
  %v1284 = vsub.f32 1.0, %v1283
  %v1285 = vmul.f32 %v1282, %v1284
  %v1286 = vadd.f32 %v1282, %v1285
  %vm1287 = vweird.f32 %v1251
  %vm1288 = vweird.f32 %v1282
  %vm1289 = vmor %vm1287, %vm1288
  %v1290 = vsel %vm1289, %v1282, %v1286
  %v1291 = vand.u32 2147483647, %v1251
  %vm1292 = vcmp.eq.f32.partialorder %v1291, 8.507059e+37
  %v1293 = vand.u32 %v1251, 2147483648
  %v1294 = vor.u32 1.1754944e-38, %v1293
  %v1295 = vsel %vm1292, %v1294, %v1290
  %v1296 = vmul.f32 1.0, %v1295
  %v1297 = vtanh.pop %v1239
  %v1298 = vmul.f32 %v1281, %v1068
  %v1299 = vmul.f32 %v1266, %v1297
  %v1300 = vadd.f32 %v1298, %v1299
  %v1301 = vtanh.pop %v1300
  %v1302 = vmul.f32 %v1296, %v1301
  %s1303 = scalar_lea.vmem %s0, 40
  %v1304 = vld [vmem:[%s1303] sm:$0xff]
  %1305 = vmatpush.msra.mxu0 %v140
  %1306 = vmatpush.msra.mxu0 %v136
  %1307 = vmatpush.msra.mxu0 %v132
  %1308 = vmatpush.msra.mxu0 %v128
  %1309 = vmatpush.msra.mxu0 %v124
  %1310 = vmatpush.msra.mxu0 %v120
  %1311 = vmatpush.msra.mxu0 %v116
  %1312 = vmatpush.msra.mxu0 %v112
  %1313 = vmatpush.msra.mxu0 %v108
  %1314 = vmatpush.msra.mxu0 %v104
  %1315 = vmatpush.msra.mxu0 %v100
  %1316 = vmatpush.msra.mxu0 %v96
  %1317 = vmatpush.msra.mxu0 %v92
  %1318 = vmatpush.msra.mxu0 %v88
  %1319 = vmatpush.msra.mxu0 %v84
  %1320 = vmatpush.msra.mxu0 %v80
  %1321 = vmatmul.f32.gmra.mxu0 %v1302
  %v1322 = vpop.f32.mrf.mxu0
  %v1323 = vadd.f32 0.0, %v1322
  %1324 = vdwg.mxu0
  %1325 = vmatpush.msra.mxu0 %v141
  %1326 = vmatpush.msra.mxu0 %v137
  %1327 = vmatpush.msra.mxu0 %v133
  %1328 = vmatpush.msra.mxu0 %v129
  %1329 = vmatpush.msra.mxu0 %v125
  %1330 = vmatpush.msra.mxu0 %v121
  %1331 = vmatpush.msra.mxu0 %v117
  %1332 = vmatpush.msra.mxu0 %v113
  %1333 = vmatpush.msra.mxu0 %v109
  %1334 = vmatpush.msra.mxu0 %v105
  %1335 = vmatpush.msra.mxu0 %v101
  %1336 = vmatpush.msra.mxu0 %v97
  %1337 = vmatpush.msra.mxu0 %v93
  %1338 = vmatpush.msra.mxu0 %v89
  %1339 = vmatpush.msra.mxu0 %v85
  %1340 = vmatpush.msra.mxu0 %v81
  %1341 = vmatmul.f32.gmra.mxu0 %v1302
  %v1342 = vpop.f32.mrf.mxu0
  %v1343 = vadd.f32 0.0, %v1342
  %1344 = vdwg.mxu0
  %1345 = vmatpush.msra.mxu0 %v142
  %1346 = vmatpush.msra.mxu0 %v138
  %1347 = vmatpush.msra.mxu0 %v134
  %1348 = vmatpush.msra.mxu0 %v130
  %1349 = vmatpush.msra.mxu0 %v126
  %1350 = vmatpush.msra.mxu0 %v122
  %1351 = vmatpush.msra.mxu0 %v118
  %1352 = vmatpush.msra.mxu0 %v114
  %1353 = vmatpush.msra.mxu0 %v110
  %1354 = vmatpush.msra.mxu0 %v106
  %1355 = vmatpush.msra.mxu0 %v102
  %1356 = vmatpush.msra.mxu0 %v98
  %1357 = vmatpush.msra.mxu0 %v94
  %1358 = vmatpush.msra.mxu0 %v90
  %1359 = vmatpush.msra.mxu0 %v86
  %1360 = vmatpush.msra.mxu0 %v82
  %1361 = vmatmul.f32.gmra.mxu0 %v1302
  %v1362 = vpop.f32.mrf.mxu0
  %v1363 = vadd.f32 0.0, %v1362
  %1364 = vdwg.mxu0
  %1365 = vmatpush.msra.mxu0 %v143
  %1366 = vmatpush.msra.mxu0 %v139
  %1367 = vmatpush.msra.mxu0 %v135
  %1368 = vmatpush.msra.mxu0 %v131
  %1369 = vmatpush.msra.mxu0 %v127
  %1370 = vmatpush.msra.mxu0 %v123
  %1371 = vmatpush.msra.mxu0 %v119
  %1372 = vmatpush.msra.mxu0 %v115
  %1373 = vmatpush.msra.mxu0 %v111
  %1374 = vmatpush.msra.mxu0 %v107
  %1375 = vmatpush.msra.mxu0 %v103
  %1376 = vmatpush.msra.mxu0 %v99
  %1377 = vmatpush.msra.mxu0 %v95
  %1378 = vmatpush.msra.mxu0 %v91
  %1379 = vmatpush.msra.mxu0 %v87
  %1380 = vmatpush.msra.mxu0 %v83
  %1381 = vmatmul.f32.gmra.mxu0 %v1302
  %v1382 = vpop.f32.mrf.mxu0
  %v1383 = vadd.f32 0.0, %v1382
  %1384 = vdwg.mxu0
  %v1386 = vsel %vm224, %v1304, 0
  %1388 = vmatpush.msra.mxu0 0.0
  %1389 = vmatpush.msra.mxu0 0.0
  %1390 = vmatpush.msra.mxu0 0.0
  %1391 = vmatpush.msra.mxu0 0.0
  %1392 = vmatpush.msra.mxu0 0.0
  %1393 = vmatpush.msra.mxu0 0.0
  %1394 = vmatpush.msra.mxu0 0.0
  %1395 = vmatpush.msra.mxu0 0.0
  %1396 = vmatpush.msra.mxu0 %v76
  %1397 = vmatpush.msra.mxu0 %v72
  %1398 = vmatpush.msra.mxu0 %v68
  %1399 = vmatpush.msra.mxu0 %v64
  %1400 = vmatpush.msra.mxu0 %v60
  %1401 = vmatpush.msra.mxu0 %v56
  %1402 = vmatpush.msra.mxu0 %v52
  %1403 = vmatpush.msra.mxu0 %v48
  %1404 = vmatmul.f32.gmra.mxu0 %v1386
  %v1405 = vpop.f32.mrf.mxu0
  %v1406 = vadd.f32 %v1323, %v1405
  %1407 = vdwg.mxu0
  %1408 = vmatpush.msra.mxu0 0.0
  %1409 = vmatpush.msra.mxu0 0.0
  %1410 = vmatpush.msra.mxu0 0.0
  %1411 = vmatpush.msra.mxu0 0.0
  %1412 = vmatpush.msra.mxu0 0.0
  %1413 = vmatpush.msra.mxu0 0.0
  %1414 = vmatpush.msra.mxu0 0.0
  %1415 = vmatpush.msra.mxu0 0.0
  %1416 = vmatpush.msra.mxu0 %v77
  %1417 = vmatpush.msra.mxu0 %v73
  %1418 = vmatpush.msra.mxu0 %v69
  %1419 = vmatpush.msra.mxu0 %v65
  %1420 = vmatpush.msra.mxu0 %v61
  %1421 = vmatpush.msra.mxu0 %v57
  %1422 = vmatpush.msra.mxu0 %v53
  %1423 = vmatpush.msra.mxu0 %v49
  %1424 = vmatmul.f32.gmra.mxu0 %v1386
  %v1425 = vpop.f32.mrf.mxu0
  %v1426 = vadd.f32 %v1343, %v1425
  %1427 = vdwg.mxu0
  %1428 = vmatpush.msra.mxu0 0.0
  %1429 = vmatpush.msra.mxu0 0.0
  %1430 = vmatpush.msra.mxu0 0.0
  %1431 = vmatpush.msra.mxu0 0.0
  %1432 = vmatpush.msra.mxu0 0.0
  %1433 = vmatpush.msra.mxu0 0.0
  %1434 = vmatpush.msra.mxu0 0.0
  %1435 = vmatpush.msra.mxu0 0.0
  %1436 = vmatpush.msra.mxu0 %v78
  %1437 = vmatpush.msra.mxu0 %v74
  %1438 = vmatpush.msra.mxu0 %v70
  %1439 = vmatpush.msra.mxu0 %v66
  %1440 = vmatpush.msra.mxu0 %v62
  %1441 = vmatpush.msra.mxu0 %v58
  %1442 = vmatpush.msra.mxu0 %v54
  %1443 = vmatpush.msra.mxu0 %v50
  %1444 = vmatmul.f32.gmra.mxu0 %v1386
  %v1445 = vpop.f32.mrf.mxu0
  %v1446 = vadd.f32 %v1363, %v1445
  %1447 = vdwg.mxu0
  %1448 = vmatpush.msra.mxu0 0.0
  %1449 = vmatpush.msra.mxu0 0.0
  %1450 = vmatpush.msra.mxu0 0.0
  %1451 = vmatpush.msra.mxu0 0.0
  %1452 = vmatpush.msra.mxu0 0.0
  %1453 = vmatpush.msra.mxu0 0.0
  %1454 = vmatpush.msra.mxu0 0.0
  %1455 = vmatpush.msra.mxu0 0.0
  %1456 = vmatpush.msra.mxu0 %v79
  %1457 = vmatpush.msra.mxu0 %v75
  %1458 = vmatpush.msra.mxu0 %v71
  %1459 = vmatpush.msra.mxu0 %v67
  %1460 = vmatpush.msra.mxu0 %v63
  %1461 = vmatpush.msra.mxu0 %v59
  %1462 = vmatpush.msra.mxu0 %v55
  %1463 = vmatpush.msra.mxu0 %v51
  %1464 = vmatmul.f32.gmra.mxu0 %v1386
  %v1465 = vpop.f32.mrf.mxu0
  %v1466 = vadd.f32 %v1383, %v1465
  %1467 = vdwg.mxu0
  %v1468 = vadd.f32 %v1406, %v39
  %v1469 = vadd.f32 %v1426, %v40
  %v1470 = vadd.f32 %v1446, %v41
  %v1471 = vadd.f32 %v1466, %v42
  %v1472 = vxor.u32 %v1468, 2147483648
  %v1473 = vxor.u32 %v1469, 2147483648
  %v1474 = vxor.u32 %v1470, 2147483648
  %v1475 = vmul.f32 %v1472, 1.442695
  %v1476 = vpow.pop %v1475
  %v1477 = vmul.f32 %v1473, 1.442695
  %v1478 = vpow.pop %v1477
  %v1479 = vmul.f32 %v1474, 1.442695
  %v1480 = vpow.pop %v1479
  %v1481 = vadd.f32 %v1476, 1.0
  %v1482 = vadd.f32 %v1478, 1.0
  %v1483 = vadd.f32 %v1480, 1.0
  %v1484 = vrcp.pop %v1481
  %v1485 = vmul.f32 %v1481, %v1484
  %v1486 = vsub.f32 1.0, %v1485
  %v1487 = vmul.f32 %v1484, %v1486
  %v1488 = vadd.f32 %v1484, %v1487
  %vm1489 = vweird.f32 %v1481
  %vm1490 = vweird.f32 %v1484
  %vm1491 = vmor %vm1489, %vm1490
  %v1492 = vsel %vm1491, %v1484, %v1488
  %v1493 = vand.u32 2147483647, %v1481
  %vm1494 = vcmp.eq.f32.partialorder %v1493, 8.507059e+37
  %v1495 = vand.u32 %v1481, 2147483648
  %v1496 = vor.u32 1.1754944e-38, %v1495
  %v1497 = vsel %vm1494, %v1496, %v1492
  %v1498 = vmul.f32 1.0, %v1497
  %v1499 = vrcp.pop %v1482
  %v1500 = vmul.f32 %v1482, %v1499
  %v1501 = vsub.f32 1.0, %v1500
  %v1502 = vmul.f32 %v1499, %v1501
  %v1503 = vadd.f32 %v1499, %v1502
  %vm1504 = vweird.f32 %v1482
  %vm1505 = vweird.f32 %v1499
  %vm1506 = vmor %vm1504, %vm1505
  %v1507 = vsel %vm1506, %v1499, %v1503
  %v1508 = vand.u32 2147483647, %v1482
  %vm1509 = vcmp.eq.f32.partialorder %v1508, 8.507059e+37
  %v1510 = vand.u32 %v1482, 2147483648
  %v1511 = vor.u32 1.1754944e-38, %v1510
  %v1512 = vsel %vm1509, %v1511, %v1507
  %v1513 = vmul.f32 1.0, %v1512
  %v1514 = vrcp.pop %v1483
  %v1515 = vmul.f32 %v1483, %v1514
  %v1516 = vsub.f32 1.0, %v1515
  %v1517 = vmul.f32 %v1514, %v1516
  %v1518 = vadd.f32 %v1514, %v1517
  %vm1519 = vweird.f32 %v1483
  %vm1520 = vweird.f32 %v1514
  %vm1521 = vmor %vm1519, %vm1520
  %v1522 = vsel %vm1521, %v1514, %v1518
  %v1523 = vand.u32 2147483647, %v1483
  %vm1524 = vcmp.eq.f32.partialorder %v1523, 8.507059e+37
  %v1525 = vand.u32 %v1483, 2147483648
  %v1526 = vor.u32 1.1754944e-38, %v1525
  %v1527 = vsel %vm1524, %v1526, %v1522
  %v1528 = vmul.f32 1.0, %v1527
  %v1529 = vtanh.pop %v1471
  %v1530 = vmul.f32 %v1513, %v1300
  %v1531 = vmul.f32 %v1498, %v1529
  %v1532 = vadd.f32 %v1530, %v1531
  %v1533 = vtanh.pop %v1532
  %v1534 = vmul.f32 %v1528, %v1533
  %s1535 = scalar_lea.vmem %s0, 48
  %v1536 = vld [vmem:[%s1535] sm:$0xff]
  %1537 = vmatpush.msra.mxu0 %v140
  %1538 = vmatpush.msra.mxu0 %v136
  %1539 = vmatpush.msra.mxu0 %v132
  %1540 = vmatpush.msra.mxu0 %v128
  %1541 = vmatpush.msra.mxu0 %v124
  %1542 = vmatpush.msra.mxu0 %v120
  %1543 = vmatpush.msra.mxu0 %v116
  %1544 = vmatpush.msra.mxu0 %v112
  %1545 = vmatpush.msra.mxu0 %v108
  %1546 = vmatpush.msra.mxu0 %v104
  %1547 = vmatpush.msra.mxu0 %v100
  %1548 = vmatpush.msra.mxu0 %v96
  %1549 = vmatpush.msra.mxu0 %v92
  %1550 = vmatpush.msra.mxu0 %v88
  %1551 = vmatpush.msra.mxu0 %v84
  %1552 = vmatpush.msra.mxu0 %v80
  %1553 = vmatmul.f32.gmra.mxu0 %v1534
  %v1554 = vpop.f32.mrf.mxu0
  %v1555 = vadd.f32 0.0, %v1554
  %1556 = vdwg.mxu0
  %1557 = vmatpush.msra.mxu0 %v141
  %1558 = vmatpush.msra.mxu0 %v137
  %1559 = vmatpush.msra.mxu0 %v133
  %1560 = vmatpush.msra.mxu0 %v129
  %1561 = vmatpush.msra.mxu0 %v125
  %1562 = vmatpush.msra.mxu0 %v121
  %1563 = vmatpush.msra.mxu0 %v117
  %1564 = vmatpush.msra.mxu0 %v113
  %1565 = vmatpush.msra.mxu0 %v109
  %1566 = vmatpush.msra.mxu0 %v105
  %1567 = vmatpush.msra.mxu0 %v101
  %1568 = vmatpush.msra.mxu0 %v97
  %1569 = vmatpush.msra.mxu0 %v93
  %1570 = vmatpush.msra.mxu0 %v89
  %1571 = vmatpush.msra.mxu0 %v85
  %1572 = vmatpush.msra.mxu0 %v81
  %1573 = vmatmul.f32.gmra.mxu0 %v1534
  %v1574 = vpop.f32.mrf.mxu0
  %v1575 = vadd.f32 0.0, %v1574
  %1576 = vdwg.mxu0
  %1577 = vmatpush.msra.mxu0 %v142
  %1578 = vmatpush.msra.mxu0 %v138
  %1579 = vmatpush.msra.mxu0 %v134
  %1580 = vmatpush.msra.mxu0 %v130
  %1581 = vmatpush.msra.mxu0 %v126
  %1582 = vmatpush.msra.mxu0 %v122
  %1583 = vmatpush.msra.mxu0 %v118
  %1584 = vmatpush.msra.mxu0 %v114
  %1585 = vmatpush.msra.mxu0 %v110
  %1586 = vmatpush.msra.mxu0 %v106
  %1587 = vmatpush.msra.mxu0 %v102
  %1588 = vmatpush.msra.mxu0 %v98
  %1589 = vmatpush.msra.mxu0 %v94
  %1590 = vmatpush.msra.mxu0 %v90
  %1591 = vmatpush.msra.mxu0 %v86
  %1592 = vmatpush.msra.mxu0 %v82
  %1593 = vmatmul.f32.gmra.mxu0 %v1534
  %v1594 = vpop.f32.mrf.mxu0
  %v1595 = vadd.f32 0.0, %v1594
  %1596 = vdwg.mxu0
  %1597 = vmatpush.msra.mxu0 %v143
  %1598 = vmatpush.msra.mxu0 %v139
  %1599 = vmatpush.msra.mxu0 %v135
  %1600 = vmatpush.msra.mxu0 %v131
  %1601 = vmatpush.msra.mxu0 %v127
  %1602 = vmatpush.msra.mxu0 %v123
  %1603 = vmatpush.msra.mxu0 %v119
  %1604 = vmatpush.msra.mxu0 %v115
  %1605 = vmatpush.msra.mxu0 %v111
  %1606 = vmatpush.msra.mxu0 %v107
  %1607 = vmatpush.msra.mxu0 %v103
  %1608 = vmatpush.msra.mxu0 %v99
  %1609 = vmatpush.msra.mxu0 %v95
  %1610 = vmatpush.msra.mxu0 %v91
  %1611 = vmatpush.msra.mxu0 %v87
  %1612 = vmatpush.msra.mxu0 %v83
  %1613 = vmatmul.f32.gmra.mxu0 %v1534
  %v1614 = vpop.f32.mrf.mxu0
  %v1615 = vadd.f32 0.0, %v1614
  %1616 = vdwg.mxu0
  %v1618 = vsel %vm224, %v1536, 0
  %1620 = vmatpush.msra.mxu0 0.0
  %1621 = vmatpush.msra.mxu0 0.0
  %1622 = vmatpush.msra.mxu0 0.0
  %1623 = vmatpush.msra.mxu0 0.0
  %1624 = vmatpush.msra.mxu0 0.0
  %1625 = vmatpush.msra.mxu0 0.0
  %1626 = vmatpush.msra.mxu0 0.0
  %1627 = vmatpush.msra.mxu0 0.0
  %1628 = vmatpush.msra.mxu0 %v76
  %1629 = vmatpush.msra.mxu0 %v72
  %1630 = vmatpush.msra.mxu0 %v68
  %1631 = vmatpush.msra.mxu0 %v64
  %1632 = vmatpush.msra.mxu0 %v60
  %1633 = vmatpush.msra.mxu0 %v56
  %1634 = vmatpush.msra.mxu0 %v52
  %1635 = vmatpush.msra.mxu0 %v48
  %1636 = vmatmul.f32.gmra.mxu0 %v1618
  %v1637 = vpop.f32.mrf.mxu0
  %v1638 = vadd.f32 %v1555, %v1637
  %1639 = vdwg.mxu0
  %1640 = vmatpush.msra.mxu0 0.0
  %1641 = vmatpush.msra.mxu0 0.0
  %1642 = vmatpush.msra.mxu0 0.0
  %1643 = vmatpush.msra.mxu0 0.0
  %1644 = vmatpush.msra.mxu0 0.0
  %1645 = vmatpush.msra.mxu0 0.0
  %1646 = vmatpush.msra.mxu0 0.0
  %1647 = vmatpush.msra.mxu0 0.0
  %1648 = vmatpush.msra.mxu0 %v77
  %1649 = vmatpush.msra.mxu0 %v73
  %1650 = vmatpush.msra.mxu0 %v69
  %1651 = vmatpush.msra.mxu0 %v65
  %1652 = vmatpush.msra.mxu0 %v61
  %1653 = vmatpush.msra.mxu0 %v57
  %1654 = vmatpush.msra.mxu0 %v53
  %1655 = vmatpush.msra.mxu0 %v49
  %1656 = vmatmul.f32.gmra.mxu0 %v1618
  %v1657 = vpop.f32.mrf.mxu0
  %v1658 = vadd.f32 %v1575, %v1657
  %1659 = vdwg.mxu0
  %1660 = vmatpush.msra.mxu0 0.0
  %1661 = vmatpush.msra.mxu0 0.0
  %1662 = vmatpush.msra.mxu0 0.0
  %1663 = vmatpush.msra.mxu0 0.0
  %1664 = vmatpush.msra.mxu0 0.0
  %1665 = vmatpush.msra.mxu0 0.0
  %1666 = vmatpush.msra.mxu0 0.0
  %1667 = vmatpush.msra.mxu0 0.0
  %1668 = vmatpush.msra.mxu0 %v78
  %1669 = vmatpush.msra.mxu0 %v74
  %1670 = vmatpush.msra.mxu0 %v70
  %1671 = vmatpush.msra.mxu0 %v66
  %1672 = vmatpush.msra.mxu0 %v62
  %1673 = vmatpush.msra.mxu0 %v58
  %1674 = vmatpush.msra.mxu0 %v54
  %1675 = vmatpush.msra.mxu0 %v50
  %1676 = vmatmul.f32.gmra.mxu0 %v1618
  %v1677 = vpop.f32.mrf.mxu0
  %v1678 = vadd.f32 %v1595, %v1677
  %1679 = vdwg.mxu0
  %1680 = vmatpush.msra.mxu0 0.0
  %1681 = vmatpush.msra.mxu0 0.0
  %1682 = vmatpush.msra.mxu0 0.0
  %1683 = vmatpush.msra.mxu0 0.0
  %1684 = vmatpush.msra.mxu0 0.0
  %1685 = vmatpush.msra.mxu0 0.0
  %1686 = vmatpush.msra.mxu0 0.0
  %1687 = vmatpush.msra.mxu0 0.0
  %1688 = vmatpush.msra.mxu0 %v79
  %1689 = vmatpush.msra.mxu0 %v75
  %1690 = vmatpush.msra.mxu0 %v71
  %1691 = vmatpush.msra.mxu0 %v67
  %1692 = vmatpush.msra.mxu0 %v63
  %1693 = vmatpush.msra.mxu0 %v59
  %1694 = vmatpush.msra.mxu0 %v55
  %1695 = vmatpush.msra.mxu0 %v51
  %1696 = vmatmul.f32.gmra.mxu0 %v1618
  %v1697 = vpop.f32.mrf.mxu0
  %v1698 = vadd.f32 %v1615, %v1697
  %1699 = vdwg.mxu0
  %v1700 = vadd.f32 %v1638, %v39
  %v1701 = vadd.f32 %v1658, %v40
  %v1702 = vadd.f32 %v1678, %v41
  %v1703 = vadd.f32 %v1698, %v42
  %v1704 = vxor.u32 %v1700, 2147483648
  %v1705 = vxor.u32 %v1701, 2147483648
  %v1706 = vxor.u32 %v1702, 2147483648
  %v1707 = vmul.f32 %v1704, 1.442695
  %v1708 = vpow.pop %v1707
  %v1709 = vmul.f32 %v1705, 1.442695
  %v1710 = vpow.pop %v1709
  %v1711 = vmul.f32 %v1706, 1.442695
  %v1712 = vpow.pop %v1711
  %v1713 = vadd.f32 %v1708, 1.0
  %v1714 = vadd.f32 %v1710, 1.0
  %v1715 = vadd.f32 %v1712, 1.0
  %v1716 = vrcp.pop %v1713
  %v1717 = vmul.f32 %v1713, %v1716
  %v1718 = vsub.f32 1.0, %v1717
  %v1719 = vmul.f32 %v1716, %v1718
  %v1720 = vadd.f32 %v1716, %v1719
  %vm1721 = vweird.f32 %v1713
  %vm1722 = vweird.f32 %v1716
  %vm1723 = vmor %vm1721, %vm1722
  %v1724 = vsel %vm1723, %v1716, %v1720
  %v1725 = vand.u32 2147483647, %v1713
  %vm1726 = vcmp.eq.f32.partialorder %v1725, 8.507059e+37
  %v1727 = vand.u32 %v1713, 2147483648
  %v1728 = vor.u32 1.1754944e-38, %v1727
  %v1729 = vsel %vm1726, %v1728, %v1724
  %v1730 = vmul.f32 1.0, %v1729
  %v1731 = vrcp.pop %v1714
  %v1732 = vmul.f32 %v1714, %v1731
  %v1733 = vsub.f32 1.0, %v1732
  %v1734 = vmul.f32 %v1731, %v1733
  %v1735 = vadd.f32 %v1731, %v1734
  %vm1736 = vweird.f32 %v1714
  %vm1737 = vweird.f32 %v1731
  %vm1738 = vmor %vm1736, %vm1737
  %v1739 = vsel %vm1738, %v1731, %v1735
  %v1740 = vand.u32 2147483647, %v1714
  %vm1741 = vcmp.eq.f32.partialorder %v1740, 8.507059e+37
  %v1742 = vand.u32 %v1714, 2147483648
  %v1743 = vor.u32 1.1754944e-38, %v1742
  %v1744 = vsel %vm1741, %v1743, %v1739
  %v1745 = vmul.f32 1.0, %v1744
  %v1746 = vrcp.pop %v1715
  %v1747 = vmul.f32 %v1715, %v1746
  %v1748 = vsub.f32 1.0, %v1747
  %v1749 = vmul.f32 %v1746, %v1748
  %v1750 = vadd.f32 %v1746, %v1749
  %vm1751 = vweird.f32 %v1715
  %vm1752 = vweird.f32 %v1746
  %vm1753 = vmor %vm1751, %vm1752
  %v1754 = vsel %vm1753, %v1746, %v1750
  %v1755 = vand.u32 2147483647, %v1715
  %vm1756 = vcmp.eq.f32.partialorder %v1755, 8.507059e+37
  %v1757 = vand.u32 %v1715, 2147483648
  %v1758 = vor.u32 1.1754944e-38, %v1757
  %v1759 = vsel %vm1756, %v1758, %v1754
  %v1760 = vmul.f32 1.0, %v1759
  %v1761 = vtanh.pop %v1703
  %v1762 = vmul.f32 %v1745, %v1532
  %v1763 = vmul.f32 %v1730, %v1761
  %v1764 = vadd.f32 %v1762, %v1763
  %v1765 = vtanh.pop %v1764
  %v1766 = vmul.f32 %v1760, %v1765
  %s1767 = scalar_lea.vmem %s0, 56
  %v1768 = vld [vmem:[%s1767] sm:$0xff]
  %1769 = vmatpush.msra.mxu0 %v140
  %1770 = vmatpush.msra.mxu0 %v136
  %1771 = vmatpush.msra.mxu0 %v132
  %1772 = vmatpush.msra.mxu0 %v128
  %1773 = vmatpush.msra.mxu0 %v124
  %1774 = vmatpush.msra.mxu0 %v120
  %1775 = vmatpush.msra.mxu0 %v116
  %1776 = vmatpush.msra.mxu0 %v112
  %1777 = vmatpush.msra.mxu0 %v108
  %1778 = vmatpush.msra.mxu0 %v104
  %1779 = vmatpush.msra.mxu0 %v100
  %1780 = vmatpush.msra.mxu0 %v96
  %1781 = vmatpush.msra.mxu0 %v92
  %1782 = vmatpush.msra.mxu0 %v88
  %1783 = vmatpush.msra.mxu0 %v84
  %1784 = vmatpush.msra.mxu0 %v80
  %1785 = vmatmul.f32.gmra.mxu0 %v1766
  %v1786 = vpop.f32.mrf.mxu0
  %v1787 = vadd.f32 0.0, %v1786
  %1788 = vdwg.mxu0
  %1789 = vmatpush.msra.mxu0 %v141
  %1790 = vmatpush.msra.mxu0 %v137
  %1791 = vmatpush.msra.mxu0 %v133
  %1792 = vmatpush.msra.mxu0 %v129
  %1793 = vmatpush.msra.mxu0 %v125
  %1794 = vmatpush.msra.mxu0 %v121
  %1795 = vmatpush.msra.mxu0 %v117
  %1796 = vmatpush.msra.mxu0 %v113
  %1797 = vmatpush.msra.mxu0 %v109
  %1798 = vmatpush.msra.mxu0 %v105
  %1799 = vmatpush.msra.mxu0 %v101
  %1800 = vmatpush.msra.mxu0 %v97
  %1801 = vmatpush.msra.mxu0 %v93
  %1802 = vmatpush.msra.mxu0 %v89
  %1803 = vmatpush.msra.mxu0 %v85
  %1804 = vmatpush.msra.mxu0 %v81
  %1805 = vmatmul.f32.gmra.mxu0 %v1766
  %v1806 = vpop.f32.mrf.mxu0
  %v1807 = vadd.f32 0.0, %v1806
  %1808 = vdwg.mxu0
  %1809 = vmatpush.msra.mxu0 %v142
  %1810 = vmatpush.msra.mxu0 %v138
  %1811 = vmatpush.msra.mxu0 %v134
  %1812 = vmatpush.msra.mxu0 %v130
  %1813 = vmatpush.msra.mxu0 %v126
  %1814 = vmatpush.msra.mxu0 %v122
  %1815 = vmatpush.msra.mxu0 %v118
  %1816 = vmatpush.msra.mxu0 %v114
  %1817 = vmatpush.msra.mxu0 %v110
  %1818 = vmatpush.msra.mxu0 %v106
  %1819 = vmatpush.msra.mxu0 %v102
  %1820 = vmatpush.msra.mxu0 %v98
  %1821 = vmatpush.msra.mxu0 %v94
  %1822 = vmatpush.msra.mxu0 %v90
  %1823 = vmatpush.msra.mxu0 %v86
  %1824 = vmatpush.msra.mxu0 %v82
  %1825 = vmatmul.f32.gmra.mxu0 %v1766
  %v1826 = vpop.f32.mrf.mxu0
  %v1827 = vadd.f32 0.0, %v1826
  %1828 = vdwg.mxu0
  %1829 = vmatpush.msra.mxu0 %v143
  %1830 = vmatpush.msra.mxu0 %v139
  %1831 = vmatpush.msra.mxu0 %v135
  %1832 = vmatpush.msra.mxu0 %v131
  %1833 = vmatpush.msra.mxu0 %v127
  %1834 = vmatpush.msra.mxu0 %v123
  %1835 = vmatpush.msra.mxu0 %v119
  %1836 = vmatpush.msra.mxu0 %v115
  %1837 = vmatpush.msra.mxu0 %v111
  %1838 = vmatpush.msra.mxu0 %v107
  %1839 = vmatpush.msra.mxu0 %v103
  %1840 = vmatpush.msra.mxu0 %v99
  %1841 = vmatpush.msra.mxu0 %v95
  %1842 = vmatpush.msra.mxu0 %v91
  %1843 = vmatpush.msra.mxu0 %v87
  %1844 = vmatpush.msra.mxu0 %v83
  %1845 = vmatmul.f32.gmra.mxu0 %v1766
  %v1846 = vpop.f32.mrf.mxu0
  %v1847 = vadd.f32 0.0, %v1846
  %1848 = vdwg.mxu0
  %v1850 = vsel %vm224, %v1768, 0
  %1852 = vmatpush.msra.mxu0 0.0
  %1853 = vmatpush.msra.mxu0 0.0
  %1854 = vmatpush.msra.mxu0 0.0
  %1855 = vmatpush.msra.mxu0 0.0
  %1856 = vmatpush.msra.mxu0 0.0
  %1857 = vmatpush.msra.mxu0 0.0
  %1858 = vmatpush.msra.mxu0 0.0
  %1859 = vmatpush.msra.mxu0 0.0
  %1860 = vmatpush.msra.mxu0 %v76
  %1861 = vmatpush.msra.mxu0 %v72
  %1862 = vmatpush.msra.mxu0 %v68
  %1863 = vmatpush.msra.mxu0 %v64
  %1864 = vmatpush.msra.mxu0 %v60
  %1865 = vmatpush.msra.mxu0 %v56
  %1866 = vmatpush.msra.mxu0 %v52
  %1867 = vmatpush.msra.mxu0 %v48
  %1868 = vmatmul.f32.gmra.mxu0 %v1850
  %v1869 = vpop.f32.mrf.mxu0
  %v1870 = vadd.f32 %v1787, %v1869
  %1871 = vdwg.mxu0
  %1872 = vmatpush.msra.mxu0 0.0
  %1873 = vmatpush.msra.mxu0 0.0
  %1874 = vmatpush.msra.mxu0 0.0
  %1875 = vmatpush.msra.mxu0 0.0
  %1876 = vmatpush.msra.mxu0 0.0
  %1877 = vmatpush.msra.mxu0 0.0
  %1878 = vmatpush.msra.mxu0 0.0
  %1879 = vmatpush.msra.mxu0 0.0
  %1880 = vmatpush.msra.mxu0 %v77
  %1881 = vmatpush.msra.mxu0 %v73
  %1882 = vmatpush.msra.mxu0 %v69
  %1883 = vmatpush.msra.mxu0 %v65
  %1884 = vmatpush.msra.mxu0 %v61
  %1885 = vmatpush.msra.mxu0 %v57
  %1886 = vmatpush.msra.mxu0 %v53
  %1887 = vmatpush.msra.mxu0 %v49
  %1888 = vmatmul.f32.gmra.mxu0 %v1850
  %v1889 = vpop.f32.mrf.mxu0
  %v1890 = vadd.f32 %v1807, %v1889
  %1891 = vdwg.mxu0
  %1892 = vmatpush.msra.mxu0 0.0
  %1893 = vmatpush.msra.mxu0 0.0
  %1894 = vmatpush.msra.mxu0 0.0
  %1895 = vmatpush.msra.mxu0 0.0
  %1896 = vmatpush.msra.mxu0 0.0
  %1897 = vmatpush.msra.mxu0 0.0
  %1898 = vmatpush.msra.mxu0 0.0
  %1899 = vmatpush.msra.mxu0 0.0
  %1900 = vmatpush.msra.mxu0 %v78
  %1901 = vmatpush.msra.mxu0 %v74
  %1902 = vmatpush.msra.mxu0 %v70
  %1903 = vmatpush.msra.mxu0 %v66
  %1904 = vmatpush.msra.mxu0 %v62
  %1905 = vmatpush.msra.mxu0 %v58
  %1906 = vmatpush.msra.mxu0 %v54
  %1907 = vmatpush.msra.mxu0 %v50
  %1908 = vmatmul.f32.gmra.mxu0 %v1850
  %v1909 = vpop.f32.mrf.mxu0
  %v1910 = vadd.f32 %v1827, %v1909
  %1911 = vdwg.mxu0
  %1912 = vmatpush.msra.mxu0 0.0
  %1913 = vmatpush.msra.mxu0 0.0
  %1914 = vmatpush.msra.mxu0 0.0
  %1915 = vmatpush.msra.mxu0 0.0
  %1916 = vmatpush.msra.mxu0 0.0
  %1917 = vmatpush.msra.mxu0 0.0
  %1918 = vmatpush.msra.mxu0 0.0
  %1919 = vmatpush.msra.mxu0 0.0
  %1920 = vmatpush.msra.mxu0 %v79
  %1921 = vmatpush.msra.mxu0 %v75
  %1922 = vmatpush.msra.mxu0 %v71
  %1923 = vmatpush.msra.mxu0 %v67
  %1924 = vmatpush.msra.mxu0 %v63
  %1925 = vmatpush.msra.mxu0 %v59
  %1926 = vmatpush.msra.mxu0 %v55
  %1927 = vmatpush.msra.mxu0 %v51
  %1928 = vmatmul.f32.gmra.mxu0 %v1850
  %v1929 = vpop.f32.mrf.mxu0
  %v1930 = vadd.f32 %v1847, %v1929
  %1931 = vdwg.mxu0
  %v1932 = vadd.f32 %v1870, %v39
  %v1933 = vadd.f32 %v1890, %v40
  %v1934 = vadd.f32 %v1910, %v41
  %v1935 = vadd.f32 %v1930, %v42
  %v1936 = vxor.u32 %v1932, 2147483648
  %v1937 = vxor.u32 %v1933, 2147483648
  %v1938 = vxor.u32 %v1934, 2147483648
  %v1939 = vmul.f32 %v1936, 1.442695
  %v1940 = vpow.pop %v1939
  %v1941 = vmul.f32 %v1937, 1.442695
  %v1942 = vpow.pop %v1941
  %v1943 = vmul.f32 %v1938, 1.442695
  %v1944 = vpow.pop %v1943
  %v1945 = vadd.f32 %v1940, 1.0
  %v1946 = vadd.f32 %v1942, 1.0
  %v1947 = vadd.f32 %v1944, 1.0
  %v1948 = vrcp.pop %v1945
  %v1949 = vmul.f32 %v1945, %v1948
  %v1950 = vsub.f32 1.0, %v1949
  %v1951 = vmul.f32 %v1948, %v1950
  %v1952 = vadd.f32 %v1948, %v1951
  %vm1953 = vweird.f32 %v1945
  %vm1954 = vweird.f32 %v1948
  %vm1955 = vmor %vm1953, %vm1954
  %v1956 = vsel %vm1955, %v1948, %v1952
  %v1957 = vand.u32 2147483647, %v1945
  %vm1958 = vcmp.eq.f32.partialorder %v1957, 8.507059e+37
  %v1959 = vand.u32 %v1945, 2147483648
  %v1960 = vor.u32 1.1754944e-38, %v1959
  %v1961 = vsel %vm1958, %v1960, %v1956
  %v1962 = vmul.f32 1.0, %v1961
  %v1963 = vrcp.pop %v1946
  %v1964 = vmul.f32 %v1946, %v1963
  %v1965 = vsub.f32 1.0, %v1964
  %v1966 = vmul.f32 %v1963, %v1965
  %v1967 = vadd.f32 %v1963, %v1966
  %vm1968 = vweird.f32 %v1946
  %vm1969 = vweird.f32 %v1963
  %vm1970 = vmor %vm1968, %vm1969
  %v1971 = vsel %vm1970, %v1963, %v1967
  %v1972 = vand.u32 2147483647, %v1946
  %vm1973 = vcmp.eq.f32.partialorder %v1972, 8.507059e+37
  %v1974 = vand.u32 %v1946, 2147483648
  %v1975 = vor.u32 1.1754944e-38, %v1974
  %v1976 = vsel %vm1973, %v1975, %v1971
  %v1977 = vmul.f32 1.0, %v1976
  %v1978 = vrcp.pop %v1947
  %v1979 = vmul.f32 %v1947, %v1978
  %v1980 = vsub.f32 1.0, %v1979
  %v1981 = vmul.f32 %v1978, %v1980
  %v1982 = vadd.f32 %v1978, %v1981
  %vm1983 = vweird.f32 %v1947
  %vm1984 = vweird.f32 %v1978
  %vm1985 = vmor %vm1983, %vm1984
  %v1986 = vsel %vm1985, %v1978, %v1982
  %v1987 = vand.u32 2147483647, %v1947
  %vm1988 = vcmp.eq.f32.partialorder %v1987, 8.507059e+37
  %v1989 = vand.u32 %v1947, 2147483648
  %v1990 = vor.u32 1.1754944e-38, %v1989
  %v1991 = vsel %vm1988, %v1990, %v1986
  %v1992 = vmul.f32 1.0, %v1991
  %v1993 = vtanh.pop %v1935
  %v1994 = vmul.f32 %v1977, %v1764
  %v1995 = vmul.f32 %v1962, %v1993
  %v1996 = vadd.f32 %v1994, %v1995
  %v1997 = vtanh.pop %v1996
  %v1998 = vmul.f32 %v1992, %v1997
  %v1999 = vld [vmem:[%s4] sm:$0xff]
  %v2000 = vld [vmem:[%s4 + $0x8] sm:$0xff]
  %v2001 = vld [vmem:[%s4 + $0x10] sm:$0xff]
  %v2002 = vld [vmem:[%s4 + $0x18] sm:$0xff]
  %v2003 = vld [vmem:[%s4 + $0x20] sm:$0xff]
  %v2004 = vld [vmem:[%s4 + $0x28] sm:$0xff]
  %v2005 = vld [vmem:[%s4 + $0x30] sm:$0xff]
  %v2006 = vld [vmem:[%s4 + $0x38] sm:$0xff]
  %v2007 = vld [vmem:[%s4 + $0x40] sm:$0xff]
  %v2008 = vld [vmem:[%s4 + $0x48] sm:$0xff]
  %v2009 = vld [vmem:[%s4 + $0x50] sm:$0xff]
  %v2010 = vld [vmem:[%s4 + $0x58] sm:$0xff]
  %v2011 = vld [vmem:[%s4 + $0x60] sm:$0xff]
  %v2012 = vld [vmem:[%s4 + $0x68] sm:$0xff]
  %v2013 = vld [vmem:[%s4 + $0x70] sm:$0xff]
  %v2014 = vld [vmem:[%s4 + $0x78] sm:$0xff]
  %v2015 = vld [vmem:[%s4 + $0x80] sm:$0xff]
  %v2016 = vld [vmem:[%s4 + $0x88] sm:$0xff]
  %v2017 = vld [vmem:[%s4 + $0x90] sm:$0xff]
  %v2018 = vld [vmem:[%s4 + $0x98] sm:$0xff]
  %v2019 = vld [vmem:[%s4 + $0xa0] sm:$0xff]
  %v2020 = vld [vmem:[%s4 + $0xa8] sm:$0xff]
  %v2021 = vld [vmem:[%s4 + $0xb0] sm:$0xff]
  %v2022 = vld [vmem:[%s4 + $0xb8] sm:$0xff]
  %v2023 = vld [vmem:[%s4 + $0xc0] sm:$0xff]
  %v2024 = vld [vmem:[%s4 + $0xc8] sm:$0xff]
  %v2025 = vld [vmem:[%s4 + $0xd0] sm:$0xff]
  %v2026 = vld [vmem:[%s4 + $0xd8] sm:$0xff]
  %v2027 = vld [vmem:[%s4 + $0xe0] sm:$0xff]
  %v2028 = vld [vmem:[%s4 + $0xe8] sm:$0xff]
  %v2029 = vld [vmem:[%s4 + $0xf0] sm:$0xff]
  %v2030 = vld [vmem:[%s4 + $0xf8] sm:$0xff]
  %v2031 = vld [vmem:[%s5] sm:$0x3]
  %v2033 = vperm.slane %v2031, 0
  %v2034 = vperm.slane %v2031, 1
  %2037 = vmatpush.msra.mxu0 %v2029
  %2038 = vmatpush.msra.mxu0 %v2027
  %2039 = vmatpush.msra.mxu0 %v2025
  %2040 = vmatpush.msra.mxu0 %v2023
  %2041 = vmatpush.msra.mxu0 %v2021
  %2042 = vmatpush.msra.mxu0 %v2019
  %2043 = vmatpush.msra.mxu0 %v2017
  %2044 = vmatpush.msra.mxu0 %v2015
  %2045 = vmatpush.msra.mxu0 %v2013
  %2046 = vmatpush.msra.mxu0 %v2011
  %2047 = vmatpush.msra.mxu0 %v2009
  %2048 = vmatpush.msra.mxu0 %v2007
  %2049 = vmatpush.msra.mxu0 %v2005
  %2050 = vmatpush.msra.mxu0 %v2003
  %2051 = vmatpush.msra.mxu0 %v2001
  %2052 = vmatpush.msra.mxu0 %v1999
  %2053 = vmatmul.f32.gmra.mxu0 %v1998
  %v2054 = vpop.f32.mrf.mxu0
  %v2055 = vadd.f32 %v2033, %v2054
  %2056 = vdwg.mxu0
  %2057 = vmatpush.msra.mxu0 %v2030
  %2058 = vmatpush.msra.mxu0 %v2028
  %2059 = vmatpush.msra.mxu0 %v2026
  %2060 = vmatpush.msra.mxu0 %v2024
  %2061 = vmatpush.msra.mxu0 %v2022
  %2062 = vmatpush.msra.mxu0 %v2020
  %2063 = vmatpush.msra.mxu0 %v2018
  %2064 = vmatpush.msra.mxu0 %v2016
  %2065 = vmatpush.msra.mxu0 %v2014
  %2066 = vmatpush.msra.mxu0 %v2012
  %2067 = vmatpush.msra.mxu0 %v2010
  %2068 = vmatpush.msra.mxu0 %v2008
  %2069 = vmatpush.msra.mxu0 %v2006
  %2070 = vmatpush.msra.mxu0 %v2004
  %2071 = vmatpush.msra.mxu0 %v2002
  %2072 = vmatpush.msra.mxu0 %v2000
  %2073 = vmatmul.f32.gmra.mxu0 %v1998
  %v2074 = vpop.f32.mrf.mxu0
  %v2075 = vadd.f32 %v2034, %v2074
  %2076 = vdwg.mxu0
  %v2077 = vmax.f32 %v2055, 0.0
  %v2078 = vmax.f32 %v2075, 0.0
  %v2079 = vld [vmem:[%s6] sm:$0xff]
  %v2080 = vld [vmem:[%s6 + $0x8] sm:$0xff]
  %v2081 = vld [vmem:[%s6 + $0x10] sm:$0xff]
  %v2082 = vld [vmem:[%s6 + $0x18] sm:$0xff]
  %v2083 = vld [vmem:[%s6 + $0x20] sm:$0xff]
  %v2084 = vld [vmem:[%s6 + $0x28] sm:$0xff]
  %v2085 = vld [vmem:[%s6 + $0x30] sm:$0xff]
  %v2086 = vld [vmem:[%s6 + $0x38] sm:$0xff]
  %v2087 = vld [vmem:[%s6 + $0x40] sm:$0xff]
  %v2088 = vld [vmem:[%s6 + $0x48] sm:$0xff]
  %v2089 = vld [vmem:[%s6 + $0x50] sm:$0xff]
  %v2090 = vld [vmem:[%s6 + $0x58] sm:$0xff]
  %v2091 = vld [vmem:[%s6 + $0x60] sm:$0xff]
  %v2092 = vld [vmem:[%s6 + $0x68] sm:$0xff]
  %v2093 = vld [vmem:[%s6 + $0x70] sm:$0xff]
  %v2094 = vld [vmem:[%s6 + $0x78] sm:$0xff]
  %v2095 = vld [vmem:[%s6 + $0x80] sm:$0xff]
  %v2096 = vld [vmem:[%s6 + $0x88] sm:$0xff]
  %v2097 = vld [vmem:[%s6 + $0x90] sm:$0xff]
  %v2098 = vld [vmem:[%s6 + $0x98] sm:$0xff]
  %v2099 = vld [vmem:[%s6 + $0xa0] sm:$0xff]
  %v2100 = vld [vmem:[%s6 + $0xa8] sm:$0xff]
  %v2101 = vld [vmem:[%s6 + $0xb0] sm:$0xff]
  %v2102 = vld [vmem:[%s6 + $0xb8] sm:$0xff]
  %v2103 = vld [vmem:[%s6 + $0xc0] sm:$0xff]
  %v2104 = vld [vmem:[%s6 + $0xc8] sm:$0xff]
  %v2105 = vld [vmem:[%s6 + $0xd0] sm:$0xff]
  %v2106 = vld [vmem:[%s6 + $0xd8] sm:$0xff]
  %v2107 = vld [vmem:[%s6 + $0xe0] sm:$0xff]
  %v2108 = vld [vmem:[%s6 + $0xe8] sm:$0xff]
  %v2109 = vld [vmem:[%s6 + $0xf0] sm:$0xff]
  %v2110 = vld [vmem:[%s6 + $0xf8] sm:$0xff]
  %v2111 = vld [vmem:[%s7] sm:$0x1]
  %v2113 = vperm.slane %v2111, 0
  %2115 = vmatpush.msra.mxu0 %v2094
  %2116 = vmatpush.msra.mxu0 %v2093
  %2117 = vmatpush.msra.mxu0 %v2092
  %2118 = vmatpush.msra.mxu0 %v2091
  %2119 = vmatpush.msra.mxu0 %v2090
  %2120 = vmatpush.msra.mxu0 %v2089
  %2121 = vmatpush.msra.mxu0 %v2088
  %2122 = vmatpush.msra.mxu0 %v2087
  %2123 = vmatpush.msra.mxu0 %v2086
  %2124 = vmatpush.msra.mxu0 %v2085
  %2125 = vmatpush.msra.mxu0 %v2084
  %2126 = vmatpush.msra.mxu0 %v2083
  %2127 = vmatpush.msra.mxu0 %v2082
  %2128 = vmatpush.msra.mxu0 %v2081
  %2129 = vmatpush.msra.mxu0 %v2080
  %2130 = vmatpush.msra.mxu0 %v2079
  %2131 = vmatmul.f32.gmra.mxu0 %v2077
  %v2132 = vpop.f32.mrf.mxu0
  %v2133 = vadd.f32 %v2113, %v2132
  %2134 = vdwg.mxu0
  %2135 = vmatpush.msra.mxu0 %v2110
  %2136 = vmatpush.msra.mxu0 %v2109
  %2137 = vmatpush.msra.mxu0 %v2108
  %2138 = vmatpush.msra.mxu0 %v2107
  %2139 = vmatpush.msra.mxu0 %v2106
  %2140 = vmatpush.msra.mxu0 %v2105
  %2141 = vmatpush.msra.mxu0 %v2104
  %2142 = vmatpush.msra.mxu0 %v2103
  %2143 = vmatpush.msra.mxu0 %v2102
  %2144 = vmatpush.msra.mxu0 %v2101
  %2145 = vmatpush.msra.mxu0 %v2100
  %2146 = vmatpush.msra.mxu0 %v2099
  %2147 = vmatpush.msra.mxu0 %v2098
  %2148 = vmatpush.msra.mxu0 %v2097
  %2149 = vmatpush.msra.mxu0 %v2096
  %2150 = vmatpush.msra.mxu0 %v2095
  %2151 = vmatmul.f32.gmra.mxu0 %v2078
  %v2152 = vpop.f32.mrf.mxu0
  %v2153 = vadd.f32 %v2133, %v2152
  %2154 = vdwg.mxu0
  %v2155 = vmax.f32 %v2153, 0.0
  %v2156 = vld [vmem:[%s8] sm:$0xff]
  %v2157 = vld [vmem:[%s8 + $0x8] sm:$0xff]
  %v2158 = vld [vmem:[%s8 + $0x10] sm:$0xff]
  %v2159 = vld [vmem:[%s8 + $0x18] sm:$0xff]
  %v2160 = vld [vmem:[%s8 + $0x20] sm:$0xff]
  %v2161 = vld [vmem:[%s8 + $0x28] sm:$0xff]
  %v2162 = vld [vmem:[%s8 + $0x30] sm:$0xff]
  %v2163 = vld [vmem:[%s8 + $0x38] sm:$0xff]
  %v2164 = vld [vmem:[%s8 + $0x40] sm:$0xff]
  %v2165 = vld [vmem:[%s8 + $0x48] sm:$0xff]
  %v2166 = vld [vmem:[%s8 + $0x50] sm:$0xff]
  %v2167 = vld [vmem:[%s8 + $0x58] sm:$0xff]
  %v2168 = vld [vmem:[%s8 + $0x60] sm:$0xff]
  %v2169 = vld [vmem:[%s8 + $0x68] sm:$0xff]
  %v2170 = vld [vmem:[%s8 + $0x70] sm:$0xff]
  %v2171 = vld [vmem:[%s8 + $0x78] sm:$0xff]
  %v2172 = vld [vmem:[%s9] sm:$0x1]
  %v2174 = vperm.slane %v2172, 0
  %2176 = vmatpush.msra.mxu0 %v2171
  %2177 = vmatpush.msra.mxu0 %v2170
  %2178 = vmatpush.msra.mxu0 %v2169
  %2179 = vmatpush.msra.mxu0 %v2168
  %2180 = vmatpush.msra.mxu0 %v2167
  %2181 = vmatpush.msra.mxu0 %v2166
  %2182 = vmatpush.msra.mxu0 %v2165
  %2183 = vmatpush.msra.mxu0 %v2164
  %2184 = vmatpush.msra.mxu0 %v2163
  %2185 = vmatpush.msra.mxu0 %v2162
  %2186 = vmatpush.msra.mxu0 %v2161
  %2187 = vmatpush.msra.mxu0 %v2160
  %2188 = vmatpush.msra.mxu0 %v2159
  %2189 = vmatpush.msra.mxu0 %v2158
  %2190 = vmatpush.msra.mxu0 %v2157
  %2191 = vmatpush.msra.mxu0 %v2156
  %2192 = vmatmul.f32.gmra.mxu0 %v2155
  %v2193 = vpop.f32.mrf.mxu0
  %v2194 = vadd.f32 %v2174, %v2193
  %2195 = vdwg.mxu0
  %2196 = vst [vmem:[%s10] sm:$0xff] %v2194
  %2197 = vst [vmem:[%s11] sm:$0xff] %v1998
  %2198 = vst [vmem:[%s11 + $0x8] sm:$0xff] %v1996
  // Predicated region
  $region42: #{lstm_actor_forward.1} parent=0 // pred_check
    _
  $region43: #{lstm_actor_forward.1} parent=0 // pred_check_branch
    %2200 = sbr.rel (0) target = $region45
  $region44: #{lstm_actor_forward.1} parent=0 // pred_region
    _
  $region45: #{lstm_actor_forward.1} parent=0 // pred_fallthru
    _
  // Predicated region
  $region46: #{lstm_actor_forward.1} parent=0 // pred_check
    _
  $region47: #{lstm_actor_forward.1} parent=0 // pred_check_branch
    %2202 = sbr.rel (0) target = $region49
  $region48: #{lstm_actor_forward.1} parent=0 // pred_region
    _
  $region49: #{lstm_actor_forward.1} parent=0 // pred_fallthru
    _
  // Predicated region
  $region50: #{lstm_actor_forward.1} parent=0 // pred_check
    _
  $region51: #{lstm_actor_forward.1} parent=0 // pred_check_branch
    %2204 = sbr.rel (0) target = $region53
  $region52: #{lstm_actor_forward.1} parent=0 // pred_region
    _
  $region53: #{lstm_actor_forward.1} parent=0 // pred_fallthru
    _
  // Predicated region
  $region54: #{lstm_actor_forward.1} parent=0 // pred_check
    _
  $region55: #{lstm_actor_forward.1} parent=0 // pred_check_branch
    %2206 = sbr.rel (0) target = $region57
  $region56: #{lstm_actor_forward.1} parent=0 // pred_region
    _
  $region57: #{lstm_actor_forward.1} parent=0 // pred_fallthru
    _

</llo_original>
